<compile_context>
chip_gen: v6e
topology: v6e:2x2x1
jax: 0.10.0
libtpu: 0.0.40
codegen_flags: <defaults>
</compile_context>

<pallas_src>
import functools

import jax
import jax.numpy as jnp
from jax.experimental import pallas as pl
from jax.experimental.pallas import tpu as pltpu

BN_EPS = 1e-5
LANE = 128


def _round_up(v, m):
    return (v + m - 1) // m * m


def _vmem_limit_bytes():
    """~75% of physical VMEM: ~96 MiB on v5e/v6e (128 MiB), ~48 MiB on v7x (64 MiB)."""
    try:
        cap = int(getattr(pltpu.get_tpu_info(), "vmem_capacity_bytes",
                          64 * 1024 * 1024))
    except Exception:
        cap = 64 * 1024 * 1024
    return max(32 * 1024 * 1024, (cap * 3) // 4)


def _bspec(block_shape, index_map, *, single_buffered=False):
    """BlockSpec; (near-)constant-index operands get one VMEM buffer when supported."""
    if single_buffered:
        try:
            return pl.BlockSpec(block_shape, index_map,
                                pipeline_mode=pl.Buffered(1))
        except Exception:
            pass
    return pl.BlockSpec(block_shape, index_map)


# ---------------------------------------------------------------------------
# Pass 0: per-node weight transforms  xr = x @ W_rel,  xroot = x @ W_root + b
# ---------------------------------------------------------------------------
def _feature_transform_kernel(x_ref, wr_ref, wn_ref, b_ref, xr_ref, xroot_ref):
    x = x_ref[...]
    xr_ref[...] = jnp.dot(x, wr_ref[...],
                          preferred_element_type=jnp.float32).astype(xr_ref.dtype)
    xroot_ref[...] = (jnp.dot(x, wn_ref[...], preferred_element_type=jnp.float32)
                      + b_ref[...]).astype(xroot_ref.dtype)


# ---------------------------------------------------------------------------
# Pass 1: h = A @ xr + xroot  (tiled reduction over source tiles)
#         + masked, shift-stabilized per-tile BN partial statistics
# ---------------------------------------------------------------------------
def _aggregate_kernel(a_ref, xr_ref, xroot_ref, h_ref, stats_ref, acc_ref, *, n_valid):
    i = pl.program_id(0)          # destination-node tile (parallel)
    k = pl.program_id(1)          # source-node tile (reduction, innermost)

    @pl.when(k == 0)
    def _():
        acc_ref[...] = xroot_ref[...].astype(jnp.float32)   # root term + bias

    # h_tile += A[i, k] @ (x @ W_rel)[k]   (bf16 operands, f32 accumulation on MXU)
    acc_ref[...] += jnp.dot(a_ref[...], xr_ref[...],
                            preferred_element_type=jnp.float32)

    @pl.when(k == pl.num_programs(1) - 1)
    def _():
        h = acc_ref[...]
        h_ref[...] = h.astype(h_ref.dtype)

        # BN partials: masked sum and sum of squared deviations from the *tile* mean
        # (Chan-combined outside) -> no catastrophic E[x^2]-E[x]^2 cancellation.
        tm = h.shape[0]
        row = i * tm + jax.lax.broadcasted_iota(jnp.int32, (tm, 1), 0)
        valid = (row < n_valid).astype(jnp.float32)
        cnt = jnp.maximum(jnp.minimum(n_valid - i * tm, tm), 1).astype(jnp.float32)
        s = jnp.sum(h * valid, axis=0, keepdims=True)                  # (1, C)
        tile_mean = s / cnt
        d = (h - tile_mean) * valid
        m2 = jnp.sum(d * d, axis=0, keepdims=True)                     # (1, C)
        stats_ref[...] = jnp.concatenate([s, m2], axis=0)[None]        # (1, 2, C)


# ---------------------------------------------------------------------------
# Pass 2: normalize + ReLU (lane-dense elementwise, in-place over bf16 h)
# ---------------------------------------------------------------------------
def _bn_relu_kernel(h_ref, scale_ref, shift_ref, o_ref):
    y = h_ref[...].astype(jnp.float32) * scale_ref[...] + shift_ref[...]
    o_ref[...] = jnp.maximum(y, 0.0).astype(o_ref.dtype)


@functools.partial(jax.jit, static_argnames=("eps", "tile_m", "tile_k"))
def graph_conv_bn(x, edge_index, w_rel, w_root, b_rel, gamma, beta,
                  *, eps=BN_EPS, tile_m=512, tile_k=1024):
    """x: [N, C_in] f32; edge_index: [2, E] int32 (row0 = src, row1 = dst);
    w_rel / w_root: [C_in, C_out] (transposed vs PyTorch's [C_out, C_in])."""
    n, c_in = x.shape
    c_out = w_rel.shape[1]
    vmem_limit = _vmem_limit_bytes()

    # ---- tiling plan (all 128-aligned => lane-dense loads/stores, full MXU tiles)
    cin_p = _round_up(c_in, LANE)
    cout_p = _round_up(c_out, LANE)
    base = _round_up(n, LANE)
    tm = min(_round_up(tile_m, LANE), base)           # dest-node tile
    n_pad = _round_up(n, tm)
    tk = min(_round_up(tile_k, LANE), n_pad)          # source-node (reduction) tile
    while n_pad % tk:
        tk -= LANE
    tn = min(512, cout_p)                             # C_out tile for pass 0
    while cout_p % tn:
        tn -= LANE
    num_i, num_k, num_j = n_pad // tm, n_pad // tk, cout_p // tn

    # ---- glue: padded bf16 operands; adjacency scattered directly in bf16 ----
    src, dst = edge_index[0], edge_index[1]
    adj = jnp.zeros((n_pad, n_pad), jnp.bfloat16).at[dst, src].add(1.0)
    x_bf = jnp.zeros((n_pad, cin_p), jnp.bfloat16).at[:n, :c_in].set(
        x.astype(jnp.bfloat16))
    w_rel_p = jnp.zeros((cin_p, cout_p), jnp.bfloat16).at[:c_in, :c_out].set(
        w_rel.astype(jnp.bfloat16))
    w_root_p = jnp.zeros((cin_p, cout_p), jnp.bfloat16).at[:c_in, :c_out].set(
        w_root.astype(jnp.bfloat16))
    b_p = jnp.zeros((1, cout_p), jnp.float32).at[0, :c_out].set(b_rel)

    # ---- pass 0 ---------------------------------------------------------------
    flops0 = 4 * n_pad * cin_p * cout_p
    bytes0 = (2 * n_pad * cin_p + 4 * cin_p * cout_p + 4 * cout_p
              + 4 * n_pad * cout_p)
    xr, xroot = pl.pallas_call(
        _feature_transform_kernel,
        out_shape=(jax.ShapeDtypeStruct((n_pad, cout_p), jnp.bfloat16),
                   jax.ShapeDtypeStruct((n_pad, cout_p), jnp.bfloat16)),
        grid=(num_i, num_j),
        in_specs=[
            pl.BlockSpec((tm, cin_p), lambda m, j: (m, 0)),
            pl.BlockSpec((cin_p, tn), lambda m, j: (0, j)),
            pl.BlockSpec((cin_p, tn), lambda m, j: (0, j)),
            pl.BlockSpec((1, tn), lambda m, j: (0, j)),
        ],
        out_specs=(pl.BlockSpec((tm, tn), lambda m, j: (m, j)),
                   pl.BlockSpec((tm, tn), lambda m, j: (m, j))),
        compiler_params=pltpu.CompilerParams(
            dimension_semantics=("parallel", "parallel"),
            vmem_limit_bytes=vmem_limit),
        cost_estimate=pl.CostEstimate(flops=flops0, transcendentals=0,
                                      bytes_accessed=bytes0),
    )(x_bf, w_rel_p, w_root_p, b_p)

    # ---- pass 1 ---------------------------------------------------------------
    flops1 = 2 * n_pad * n_pad * cout_p
    bytes1 = (2 * n_pad * n_pad + 2 * num_i * n_pad * cout_p
              + 4 * n_pad * cout_p + 8 * num_i * cout_p)
    h_pad, stats = pl.pallas_call(
        functools.partial(_aggregate_kernel, n_valid=n),
        out_shape=(jax.ShapeDtypeStruct((n_pad, cout_p), jnp.bfloat16),
                   jax.ShapeDtypeStruct((num_i, 2, cout_p), jnp.float32)),
        grid=(num_i, num_k),
        in_specs=[
            pl.BlockSpec((tm, tk), lambda i, k: (i, k)),               # A tile
            pl.BlockSpec((tk, cout_p), lambda i, k: (k, 0)),           # xr[src tile]
            _bspec((tm, cout_p), lambda i, k: (i, 0),
                   single_buffered=True),                              # xroot[dst tile]
        ],
        out_specs=(pl.BlockSpec((tm, cout_p), lambda i, k: (i, 0)),
                   pl.BlockSpec((1, 2, cout_p), lambda i, k: (i, 0, 0))),
        scratch_shapes=[pltpu.VMEM((tm, cout_p), jnp.float32)],
        compiler_params=pltpu.CompilerParams(
            dimension_semantics=("parallel", "arbitrary"),
            vmem_limit_bytes=vmem_limit),
        cost_estimate=pl.CostEstimate(flops=flops1, transcendentals=0,
                                      bytes_accessed=bytes1),
    )(adj, xr, xroot)

    # ---- tiny O(num_i * C) BN epilogue: Chan-combined mean / variance ---------
    counts = jnp.clip(n - jnp.arange(num_i, dtype=jnp.float32) * tm, 0.0, float(tm))
    sums, m2s = stats[:, 0, :], stats[:, 1, :]
    mean = jnp.sum(sums, axis=0) / n
    tile_mean = sums / jnp.maximum(counts, 1.0)[:, None]
    m2 = jnp.sum(m2s, axis=0) + jnp.sum(
        counts[:, None] * (tile_mean - mean) ** 2, axis=0)
    var = m2 / n                                         # biased batch variance
    gamma_p = jnp.ones((cout_p,), jnp.float32).at[:c_out].set(gamma)
    beta_p = jnp.zeros((cout_p,), jnp.float32).at[:c_out].set(beta)
    inv_std = jax.lax.rsqrt(var + eps)
    scale = (gamma_p * inv_std).reshape(1, cout_p)
    shift = (beta_p - mean * gamma_p * inv_std).reshape(1, cout_p)

    # ---- pass 2: normalize + ReLU, writing h in place (bf16, aliased) ---------
    out_pad = pl.pallas_call(
        _bn_relu_kernel,
        out_shape=jax.ShapeDtypeStruct((n_pad, cout_p), jnp.bfloat16),
        grid=(num_i,),
        in_specs=[
            pl.BlockSpec((tm, cout_p), lambda i: (i, 0)),
            _bspec((1, cout_p), lambda i: (0, 0), single_buffered=True),
            _bspec((1, cout_p), lambda i: (0, 0), single_buffered=True),
        ],
        out_specs=pl.BlockSpec((tm, cout_p), lambda i: (i, 0)),
        input_output_aliases={0: 0},
        compiler_params=pltpu.CompilerParams(
            dimension_semantics=("parallel",),
            vmem_limit_bytes=vmem_limit),
        cost_estimate=pl.CostEstimate(flops=3 * n_pad * cout_p, transcendentals=0,
                                      bytes_accessed=4 * n_pad * cout_p + 8 * cout_p),
    )(h_pad, scale, shift)

    # data.x <- out ; data.edge_index / data.batch pass through unchanged.
    return out_pad[:n, :c_out].astype(jnp.float32)


def _reference_forward(x, edge_index, w_rel, w_root, b_rel, gamma, beta, eps=BN_EPS):
    """Pure-JAX f32 reference with the original PyTorch association / semantics."""
    n = x.shape[0]
    adj = jnp.zeros((n, n), jnp.float32).at[edge_index[1], edge_index[0]].add(1.0)
    h = (adj @ x) @ w_rel + x @ w_root + b_rel
    mean = h.mean(axis=0)
    var = jnp.mean((h - mean) ** 2, axis=0)
    y = (h - mean) * jax.lax.rsqrt(var + eps) * gamma + beta
    return jnp.maximum(y, 0.0)


if __name__ == "__main__":
    root = jax.random.PRNGKey(0)

    def make_case(key, n, e, cin, cout):
        ks = jax.random.split(key, 7)
        x = jax.random.normal(ks[0], (n, cin), jnp.float32)
        edge_index = jax.random.randint(ks[1], (2, e), 0, n, jnp.int32)
        w_rel = jax.random.normal(ks[2], (cin, cout), jnp.float32) * 0.1
        w_root = jax.random.normal(ks[3], (cin, cout), jnp.float32) * 0.1
        b_rel = jax.random.normal(ks[4], (cout,), jnp.float32) * 0.1
        gamma = 1.0 + 0.1 * jax.random.normal(ks[5], (cout,), jnp.float32)
        beta = 0.1 * jax.random.normal(ks[6], (cout,), jnp.float32)
        return x, edge_index, w_rel, w_root, b_rel, gamma, beta

    k1, k2 = jax.random.split(root)

    # Case 1: tiny graph (single-tile path), small shapes from the module spec.
    args1 = make_case(k1, 16, 32, 4, 8)
    out1 = jax.block_until_ready(graph_conv_bn(*args1))
    ref1 = _reference_forward(*args1)
    assert out1.shape == (16, 8)
    assert bool(jnp.all(out1 >= 0.0))                      # ReLU output
    assert bool(jnp.max(jnp.abs(out1 - ref1)) < 1e-1), "case1 mismatch vs reference"

    # Case 2: multi-tile grid + masked padded rows (n % tile != 0, num_i > 1).
    args2 = make_case(k2, 200, 600, 24, 40)
    out2 = jax.block_until_ready(graph_conv_bn(*args2, tile_m=128, tile_k=128))
    ref2 = _reference_forward(*args2)
    assert out2.shape == (200, 40)
    assert bool(jnp.all(out2 >= 0.0))
    assert bool(jnp.max(jnp.abs(out2 - ref2)) < 1e-1), "case2 mismatch vs reference"

    print("KERNEL_OK")
</pallas_src>

<mosaic_0001>
module attributes {stable_mosaic.version = 11 : i64} {
  func.func @_feature_transform_kernel(%arg0: i32, %arg1: i32, %arg2: memref<128x128xbf16, #tpu.memory_space<vmem>>, %arg3: memref<128x128xbf16, #tpu.memory_space<vmem>>, %arg4: memref<128x128xbf16, #tpu.memory_space<vmem>>, %arg5: memref<1x128xf32, #tpu.memory_space<vmem>>, %arg6: memref<128x128xbf16, #tpu.memory_space<vmem>>, %arg7: memref<128x128xbf16, #tpu.memory_space<vmem>>) attributes {dimension_semantics = [#tpu.dimension_semantics<parallel>, #tpu.dimension_semantics<parallel>], iteration_bounds = array<i64: 1, 1>, scalar_prefetch = 0 : i64, scratch_operands = 0 : i64, tpu.core_type = #tpu.core_type<tc>, window_params = [{transform_indices = @transform_0, window_bounds = array<i64: 128, 128>}, {transform_indices = @transform_1, window_bounds = array<i64: 128, 128>}, {transform_indices = @transform_2, window_bounds = array<i64: 128, 128>}, {transform_indices = @transform_3, window_bounds = array<i64: 1, 128>}, {transform_indices = @transform_4, window_bounds = array<i64: 128, 128>}, {transform_indices = @transform_5, window_bounds = array<i64: 128, 128>}]} {
    %c0 = arith.constant 0 : index
    %c0_0 = arith.constant 0 : index
    %0 = vector.load %arg2[%c0, %c0_0] : memref<128x128xbf16, #tpu.memory_space<vmem>>, vector<128x128xbf16>
    %c0_1 = arith.constant 0 : index
    %c0_2 = arith.constant 0 : index
    %1 = vector.load %arg3[%c0_1, %c0_2] : memref<128x128xbf16, #tpu.memory_space<vmem>>, vector<128x128xbf16>
    %cst = arith.constant dense<0.000000e+00> : vector<128x128xf32>
    %2 = tpu.matmul %0, %1, %cst {dimension_numbers = #tpu.dot_dimension_numbers<[1], [0], [0], [1], [0, 0, 1, 1], [], []>} : vector<128x128xbf16>, vector<128x128xbf16>, vector<128x128xf32> -> vector<128x128xf32>
    %3 = arith.truncf %2 : vector<128x128xf32> to vector<128x128xbf16>
    %c0_3 = arith.constant 0 : index
    %c0_4 = arith.constant 0 : index
    %4 = vector.load %arg6[%c0_3, %c0_4] : memref<128x128xbf16, #tpu.memory_space<vmem>>, vector<128x128xbf16>
    tpu.vector_store %arg6[%c0_3, %c0_4], %3 {strides = array<i32>} : memref<128x128xbf16, #tpu.memory_space<vmem>>, vector<128x128xbf16>,
    %c0_5 = arith.constant 0 : index
    %c0_6 = arith.constant 0 : index
    %5 = vector.load %arg4[%c0_5, %c0_6] : memref<128x128xbf16, #tpu.memory_space<vmem>>, vector<128x128xbf16>
    %cst_7 = arith.constant dense<0.000000e+00> : vector<128x128xf32>
    %6 = tpu.matmul %0, %5, %cst_7 {dimension_numbers = #tpu.dot_dimension_numbers<[1], [0], [0], [1], [0, 0, 1, 1], [], []>} : vector<128x128xbf16>, vector<128x128xbf16>, vector<128x128xf32> -> vector<128x128xf32>
    %c0_8 = arith.constant 0 : index
    %c0_9 = arith.constant 0 : index
    %7 = vector.load %arg5[%c0_8, %c0_9] : memref<1x128xf32, #tpu.memory_space<vmem>>, vector<1x128xf32>
    %8 = vector.broadcast %7 : vector<1x128xf32> to vector<128x128xf32>
    %9 = arith.addf %6, %8 : vector<128x128xf32>
    %10 = arith.truncf %9 : vector<128x128xf32> to vector<128x128xbf16>
    %c0_10 = arith.constant 0 : index
    %c0_11 = arith.constant 0 : index
    %11 = vector.load %arg7[%c0_10, %c0_11] : memref<128x128xbf16, #tpu.memory_space<vmem>>, vector<128x128xbf16>
    tpu.vector_store %arg7[%c0_10, %c0_11], %10 {strides = array<i32>} : memref<128x128xbf16, #tpu.memory_space<vmem>>, vector<128x128xbf16>,
    return
  }
  func.func @transform_0(%arg0: i32, %arg1: i32) -> (i32, i32) {
    %c0_i32 = arith.constant 0 : i32
    %c0_i32_0 = arith.constant 0 : i32
    return %arg0, %c0_i32 : i32, i32
  }
  func.func @transform_1(%arg0: i32, %arg1: i32) -> (i32, i32) {
    %c0_i32 = arith.constant 0 : i32
    %c0_i32_0 = arith.constant 0 : i32
    return %c0_i32, %arg1 : i32, i32
  }
  func.func @transform_2(%arg0: i32, %arg1: i32) -> (i32, i32) {
    %c0_i32 = arith.constant 0 : i32
    %c0_i32_0 = arith.constant 0 : i32
    return %c0_i32, %arg1 : i32, i32
  }
  func.func @transform_3(%arg0: i32, %arg1: i32) -> (i32, i32) {
    %c0_i32 = arith.constant 0 : i32
    %c0_i32_0 = arith.constant 0 : i32
    return %c0_i32, %arg1 : i32, i32
  }
  func.func @transform_4(%arg0: i32, %arg1: i32) -> (i32, i32) {
    %c0_i32 = arith.constant 0 : i32
    return %arg0, %arg1 : i32, i32
  }
  func.func @transform_5(%arg0: i32, %arg1: i32) -> (i32, i32) {
    %c0_i32 = arith.constant 0 : i32
    return %arg0, %arg1 : i32, i32
  }
}

module attributes {stable_mosaic.version = 11 : i64} {
  func.func @_aggregate_kernel(%arg0: i32, %arg1: i32, %arg2: memref<128x128xbf16, #tpu.memory_space<vmem>>, %arg3: memref<128x128xbf16, #tpu.memory_space<vmem>>, %arg4: memref<128x128xbf16, #tpu.memory_space<vmem>>, %arg5: memref<128x128xbf16, #tpu.memory_space<vmem>>, %arg6: memref<1x2x128xf32, #tpu.memory_space<vmem>>, %arg7: memref<128x128xf32, #tpu.memory_space<vmem>>) attributes {dimension_semantics = [#tpu.dimension_semantics<parallel>, #tpu.dimension_semantics<arbitrary>], iteration_bounds = array<i64: 1, 1>, scalar_prefetch = 0 : i64, scratch_operands = 1 : i64, tpu.core_type = #tpu.core_type<tc>, window_params = [{transform_indices = @transform_0, window_bounds = array<i64: 128, 128>}, {transform_indices = @transform_1, window_bounds = array<i64: 128, 128>}, {pipeline_mode = #tpu.pipeline_mode<synchronous>, transform_indices = @transform_2, window_bounds = array<i64: 128, 128>}, {transform_indices = @transform_3, window_bounds = array<i64: 128, 128>}, {transform_indices = @transform_4, window_bounds = array<i64: 1, 2, 128>}]} {
    %c0_i32 = arith.constant 0 : i32
    %0 = arith.cmpi eq, %arg1, %c0_i32 : i32
    %1 = arith.extui %0 : i1 to i32
    %c0_i32_0 = arith.constant 0 : i32
    %2 = arith.cmpi ne, %1, %c0_i32_0 : i32
    scf.if %2 {
      %c0_10 = arith.constant 0 : index
      %c0_11 = arith.constant 0 : index
      %12 = vector.load %arg4[%c0_10, %c0_11] : memref<128x128xbf16, #tpu.memory_space<vmem>>, vector<128x128xbf16>
      %13 = arith.extf %12 : vector<128x128xbf16> to vector<128x128xf32>
      %c0_12 = arith.constant 0 : index
      %c0_13 = arith.constant 0 : index
      %14 = vector.load %arg7[%c0_12, %c0_13] : memref<128x128xf32, #tpu.memory_space<vmem>>, vector<128x128xf32>
      tpu.vector_store %arg7[%c0_12, %c0_13], %13 {strides = array<i32>} : memref<128x128xf32, #tpu.memory_space<vmem>>, vector<128x128xf32>,
    } else {
    }
    %c0 = arith.constant 0 : index
    %c0_1 = arith.constant 0 : index
    %3 = vector.load %arg7[%c0, %c0_1] : memref<128x128xf32, #tpu.memory_space<vmem>>, vector<128x128xf32>
    %c0_2 = arith.constant 0 : index
    %c0_3 = arith.constant 0 : index
    %4 = vector.load %arg2[%c0_2, %c0_3] : memref<128x128xbf16, #tpu.memory_space<vmem>>, vector<128x128xbf16>
    %c0_4 = arith.constant 0 : index
    %c0_5 = arith.constant 0 : index
    %5 = vector.load %arg3[%c0_4, %c0_5] : memref<128x128xbf16, #tpu.memory_space<vmem>>, vector<128x128xbf16>
    %cst = arith.constant dense<0.000000e+00> : vector<128x128xf32>
    %6 = tpu.matmul %4, %5, %cst {dimension_numbers = #tpu.dot_dimension_numbers<[1], [0], [0], [1], [0, 0, 1, 1], [], []>} : vector<128x128xbf16>, vector<128x128xbf16>, vector<128x128xf32> -> vector<128x128xf32>
    %7 = arith.addf %3, %6 : vector<128x128xf32>
    %c0_6 = arith.constant 0 : index
    %c0_7 = arith.constant 0 : index
    %8 = vector.load %arg7[%c0_6, %c0_7] : memref<128x128xf32, #tpu.memory_space<vmem>>, vector<128x128xf32>
    tpu.vector_store %arg7[%c0_6, %c0_7], %7 {strides = array<i32>} : memref<128x128xf32, #tpu.memory_space<vmem>>, vector<128x128xf32>,
    %c0_i32_8 = arith.constant 0 : i32
    %9 = arith.cmpi eq, %arg1, %c0_i32_8 : i32
    %10 = arith.extui %9 : i1 to i32
    %c0_i32_9 = arith.constant 0 : i32
    %11 = arith.cmpi ne, %10, %c0_i32_9 : i32
    scf.if %11 {
      %c0_10 = arith.constant 0 : index
      %c0_11 = arith.constant 0 : index
      %12 = vector.load %arg7[%c0_10, %c0_11] : memref<128x128xf32, #tpu.memory_space<vmem>>, vector<128x128xf32>
      %13 = arith.truncf %12 : vector<128x128xf32> to vector<128x128xbf16>
      %c0_12 = arith.constant 0 : index
      %c0_13 = arith.constant 0 : index
      %14 = vector.load %arg5[%c0_12, %c0_13] : memref<128x128xbf16, #tpu.memory_space<vmem>>, vector<128x128xbf16>
      tpu.vector_store %arg5[%c0_12, %c0_13], %13 {strides = array<i32>} : memref<128x128xbf16, #tpu.memory_space<vmem>>, vector<128x128xbf16>,
      %c128_i32 = arith.constant 128 : i32
      %15 = arith.muli %arg0, %c128_i32 : i32
      %16 = tpu.iota {dimensions = array<i32: 0>} : vector<128x1xi32>
      %17 = vector.broadcast %15 : i32 to vector<128x1xi32>
      %18 = arith.addi %17, %16 : vector<128x1xi32>
      %c16_i32 = arith.constant 16 : i32
      %19 = vector.broadcast %c16_i32 : i32 to vector<128x1xi32>
      %20 = arith.cmpi slt, %18, %19 : vector<128x1xi32>
      %21 = arith.extui %20 : vector<128x1xi1> to vector<128x1xi32>
      %22 = arith.sitofp %21 : vector<128x1xi32> to vector<128x1xf32>
      %c128_i32_14 = arith.constant 128 : i32
      %23 = arith.muli %arg0, %c128_i32_14 : i32
      %c16_i32_15 = arith.constant 16 : i32
      %24 = arith.subi %c16_i32_15, %23 : i32
      %c128_i32_16 = arith.constant 128 : i32
      %25 = arith.minsi %24, %c128_i32_16 : i32
      %c1_i32 = arith.constant 1 : i32
      %26 = arith.maxsi %25, %c1_i32 : i32
      %27 = arith.sitofp %26 : i32 to f32
      %28 = vector.broadcast %22 : vector<128x1xf32> to vector<128x128xf32>
      %29 = arith.mulf %12, %28 : vector<128x128xf32>
      %cst_17 = arith.constant dense<0.000000e+00> : vector<128xf32>
      %30 = vector.multi_reduction <add>, %29, %cst_17 [0] : vector<128x128xf32> to vector<128xf32>
      %31 = vector.shape_cast %30 : vector<128xf32> to vector<1x128xf32>
      %32 = vector.broadcast %27 : f32 to vector<1x128xf32>
      %33 = arith.divf %31, %32 : vector<1x128xf32>
      %34 = vector.broadcast %33 : vector<1x128xf32> to vector<128x128xf32>
      %35 = arith.subf %12, %34 : vector<128x128xf32>
      %36 = vector.broadcast %22 : vector<128x1xf32> to vector<128x128xf32>
      %37 = arith.mulf %35, %36 : vector<128x128xf32>
      %38 = arith.mulf %37, %37 : vector<128x128xf32>
      %cst_18 = arith.constant dense<0.000000e+00> : vector<128xf32>
      %39 = vector.multi_reduction <add>, %38, %cst_18 [0] : vector<128x128xf32> to vector<128xf32>
      %40 = vector.shape_cast %39 : vector<128xf32> to vector<1x128xf32>
      %41 = tpu.concatenate %31, %40 in 0 : vector<1x128xf32>, vector<1x128xf32> -> vector<2x128xf32>
      %42 = vector.shape_cast %41 : vector<2x128xf32> to vector<1x2x128xf32>
      %c0_19 = arith.constant 0 : index
      %c0_20 = arith.constant 0 : index
      %c0_21 = arith.constant 0 : index
      %43 = vector.load %arg6[%c0_19, %c0_20, %c0_21] : memref<1x2x128xf32, #tpu.memory_space<vmem>>, vector<1x2x128xf32>
      tpu.vector_store %arg6[%c0_19, %c0_20, %c0_21], %42 {strides = array<i32>} : memref<1x2x128xf32, #tpu.memory_space<vmem>>, vector<1x2x128xf32>,
    } else {
    }
    return
  }
  func.func @transform_0(%arg0: i32, %arg1: i32) -> (i32, i32) {
    %c0_i32 = arith.constant 0 : i32
    return %arg0, %arg1 : i32, i32
  }
  func.func @transform_1(%arg0: i32, %arg1: i32) -> (i32, i32) {
    %c0_i32 = arith.constant 0 : i32
    %c0_i32_0 = arith.constant 0 : i32
    return %arg1, %c0_i32 : i32, i32
  }
  func.func @transform_2(%arg0: i32, %arg1: i32) -> (i32, i32) {
    %c0_i32 = arith.constant 0 : i32
    %c0_i32_0 = arith.constant 0 : i32
    return %arg0, %c0_i32 : i32, i32
  }
  func.func @transform_3(%arg0: i32, %arg1: i32) -> (i32, i32) {
    %c0_i32 = arith.constant 0 : i32
    %c0_i32_0 = arith.constant 0 : i32
    return %arg0, %c0_i32 : i32, i32
  }
  func.func @transform_4(%arg0: i32, %arg1: i32) -> (i32, i32, i32) {
    %c0_i32 = arith.constant 0 : i32
    %c0_i32_0 = arith.constant 0 : i32
    %c0_i32_1 = arith.constant 0 : i32
    return %arg0, %c0_i32, %c0_i32_0 : i32, i32, i32
  }
}

module attributes {stable_mosaic.version = 11 : i64} {
  func.func @_bn_relu_kernel(%arg0: i32, %arg1: memref<128x128xbf16, #tpu.memory_space<vmem>>, %arg2: memref<1x128xf32, #tpu.memory_space<vmem>>, %arg3: memref<1x128xf32, #tpu.memory_space<vmem>>, %arg4: memref<128x128xbf16, #tpu.memory_space<vmem>>) attributes {dimension_semantics = [#tpu.dimension_semantics<parallel>], iteration_bounds = array<i64: 1>, scalar_prefetch = 0 : i64, scratch_operands = 0 : i64, tpu.core_type = #tpu.core_type<tc>, window_params = [{transform_indices = @transform_0, window_bounds = array<i64: 128, 128>}, {pipeline_mode = #tpu.pipeline_mode<synchronous>, transform_indices = @transform_1, window_bounds = array<i64: 1, 128>}, {pipeline_mode = #tpu.pipeline_mode<synchronous>, transform_indices = @transform_2, window_bounds = array<i64: 1, 128>}, {transform_indices = @transform_3, window_bounds = array<i64: 128, 128>}]} {
    %c0 = arith.constant 0 : index
    %c0_0 = arith.constant 0 : index
    %0 = vector.load %arg1[%c0, %c0_0] : memref<128x128xbf16, #tpu.memory_space<vmem>>, vector<128x128xbf16>
    %1 = arith.extf %0 : vector<128x128xbf16> to vector<128x128xf32>
    %c0_1 = arith.constant 0 : index
    %c0_2 = arith.constant 0 : index
    %2 = vector.load %arg2[%c0_1, %c0_2] : memref<1x128xf32, #tpu.memory_space<vmem>>, vector<1x128xf32>
    %3 = vector.broadcast %2 : vector<1x128xf32> to vector<128x128xf32>
    %4 = arith.mulf %1, %3 : vector<128x128xf32>
    %c0_3 = arith.constant 0 : index
    %c0_4 = arith.constant 0 : index
    %5 = vector.load %arg3[%c0_3, %c0_4] : memref<1x128xf32, #tpu.memory_space<vmem>>, vector<1x128xf32>
    %6 = vector.broadcast %5 : vector<1x128xf32> to vector<128x128xf32>
    %7 = arith.addf %4, %6 : vector<128x128xf32>
    %cst = arith.constant 0.000000e+00 : f32
    %8 = vector.broadcast %cst : f32 to vector<128x128xf32>
    %9 = arith.maximumf %7, %8 : vector<128x128xf32>
    %10 = arith.truncf %9 : vector<128x128xf32> to vector<128x128xbf16>
    %c0_5 = arith.constant 0 : index
    %c0_6 = arith.constant 0 : index
    %11 = vector.load %arg4[%c0_5, %c0_6] : memref<128x128xbf16, #tpu.memory_space<vmem>>, vector<128x128xbf16>
    tpu.vector_store %arg4[%c0_5, %c0_6], %10 {strides = array<i32>} : memref<128x128xbf16, #tpu.memory_space<vmem>>, vector<128x128xbf16>,
    return
  }
  func.func @transform_0(%arg0: i32) -> (i32, i32) {
    %c0_i32 = arith.constant 0 : i32
    %c0_i32_0 = arith.constant 0 : i32
    return %arg0, %c0_i32 : i32, i32
  }
  func.func @transform_1(%arg0: i32) -> (i32, i32) {
    %c0_i32 = arith.constant 0 : i32
    %c0_i32_0 = arith.constant 0 : i32
    %c0_i32_1 = arith.constant 0 : i32
    return %c0_i32, %c0_i32_0 : i32, i32
  }
  func.func @transform_2(%arg0: i32) -> (i32, i32) {
    %c0_i32 = arith.constant 0 : i32
    %c0_i32_0 = arith.constant 0 : i32
    %c0_i32_1 = arith.constant 0 : i32
    return %c0_i32, %c0_i32_0 : i32, i32
  }
  func.func @transform_3(%arg0: i32) -> (i32, i32) {
    %c0_i32 = arith.constant 0 : i32
    %c0_i32_0 = arith.constant 0 : i32
    return %arg0, %c0_i32 : i32, i32
  }
}

</mosaic_0001>

<llo_original>
// kernel: graph_conv_bn.5
$region0: #{graph_conv_bn.5}
  #allocation0 [shape = 'u32[]', space=smem, size = 0x4, offset = 0x4, fixed_abs, tag = 'smem constant byte address 0x4 - core index']
  #allocation1 [shape = 'u32[144,128]{1,0:T(1,128)}', space=vmem, size = 0x12000, scoped, tag = 'internal scratch']
  %s0 = inlined_call_operand.vmem [shape: bf16[128,128], index: 0, kind: input, shape index: {}, may-alias: {0,3}]
  %s1 = inlined_call_operand.vmem [shape: f32[1,128], index: 1, kind: input, shape index: {}]
  %s2 = inlined_call_operand.vmem [shape: f32[1,128], index: 2, kind: input, shape index: {}]
  %s3 = inlined_call_operand.vmem [shape: bf16[128,128], index: 3, kind: output, shape index: {}, may-alias: {0,3}]
  %s4 = sld [smem:[#allocation0]]
  $region22: #{graph_conv_bn.5} parent=0
    _
  %s6 = ssub.s32 1, %s4
  %s7 = scalar_select 0, %s6, %s4
  // Predicated region
  $region2: #{graph_conv_bn.5} parent=0 // pred_check
    _
  $region3: #{graph_conv_bn.5} parent=0 // pred_check_branch
    %9 = sbr.rel (0) target = $region5
  $region4: #{graph_conv_bn.5} parent=0 // pred_region
    _
  $region5: #{graph_conv_bn.5} parent=0 // pred_fallthru
    _
  // Predicated region
  $region6: #{graph_conv_bn.5} parent=0 // pred_check
    _
  $region7: #{graph_conv_bn.5} parent=0 // pred_check_branch
    %11 = sbr.rel (0) target = $region9
  $region8: #{graph_conv_bn.5} parent=0 // pred_region
    _
  $region9: #{graph_conv_bn.5} parent=0 // pred_fallthru
    _
  // Predicated region
  $region10: #{graph_conv_bn.5} parent=0 // pred_check
    _
  $region11: #{graph_conv_bn.5} parent=0 // pred_check_branch
    %13 = sbr.rel (0) target = $region13
  $region12: #{graph_conv_bn.5} parent=0 // pred_region
    _
  $region13: #{graph_conv_bn.5} parent=0 // pred_fallthru
    _
  %v14 = vld [vmem:[%s0] sm:$0xf]
  %v15 = vld [vmem:[%s0 + $0x4] sm:$0xf]
  %v16 = vld [vmem:[%s0 + $0x8] sm:$0xf]
  %v17 = vld [vmem:[%s0 + $0xc] sm:$0xf]
  %v18 = vld [vmem:[%s0 + $0x10] sm:$0xf]
  %v19 = vld [vmem:[%s0 + $0x14] sm:$0xf]
  %v20 = vld [vmem:[%s0 + $0x18] sm:$0xf]
  %v21 = vld [vmem:[%s0 + $0x1c] sm:$0xf]
  %v22 = vld [vmem:[%s0 + $0x20] sm:$0xf]
  %v23 = vld [vmem:[%s0 + $0x24] sm:$0xf]
  %v24 = vld [vmem:[%s0 + $0x28] sm:$0xf]
  %v25 = vld [vmem:[%s0 + $0x2c] sm:$0xf]
  %v26 = vld [vmem:[%s0 + $0x30] sm:$0xf]
  %v27 = vld [vmem:[%s0 + $0x34] sm:$0xf]
  %v28 = vld [vmem:[%s0 + $0x38] sm:$0xf]
  %v29 = vld [vmem:[%s0 + $0x3c] sm:$0xf]
  %v30 = vunpack.c.l.bf16 %v14
  %v31 = vunpack.c.l.bf16 %v15
  %v32 = vunpack.c.l.bf16 %v16
  %v33 = vunpack.c.l.bf16 %v17
  %v34 = vunpack.c.l.bf16 %v18
  %v35 = vunpack.c.l.bf16 %v19
  %v36 = vunpack.c.l.bf16 %v20
  %v37 = vunpack.c.l.bf16 %v21
  %v38 = vunpack.c.l.bf16 %v22
  %v39 = vunpack.c.l.bf16 %v23
  %v40 = vunpack.c.l.bf16 %v24
  %v41 = vunpack.c.l.bf16 %v25
  %v42 = vunpack.c.l.bf16 %v26
  %v43 = vunpack.c.l.bf16 %v27
  %v44 = vunpack.c.l.bf16 %v28
  %v45 = vunpack.c.l.bf16 %v29
  %v46 = vld [vmem:[%s1] sm:$0x1]
  %v48 = vlaneseq
  %v49 = vshrl.u32 %v48, 7
  %v50 = vsub.s32 0, %v49
  %v51 = vrot.slane %v46, %v50
  %v53 = vmul.f32 %v30, %v51
  %v54 = vmul.f32 %v31, %v51
  %v55 = vmul.f32 %v32, %v51
  %v56 = vmul.f32 %v33, %v51
  %v57 = vmul.f32 %v34, %v51
  %v58 = vmul.f32 %v35, %v51
  %v59 = vmul.f32 %v36, %v51
  %v60 = vmul.f32 %v37, %v51
  %v61 = vmul.f32 %v38, %v51
  %v62 = vmul.f32 %v39, %v51
  %v63 = vmul.f32 %v40, %v51
  %v64 = vmul.f32 %v41, %v51
  %v65 = vmul.f32 %v42, %v51
  %v66 = vmul.f32 %v43, %v51
  %v67 = vmul.f32 %v44, %v51
  %v68 = vmul.f32 %v45, %v51
  %v69 = vld [vmem:[%s2] sm:$0x1]
  %v71 = vlaneseq
  %v72 = vshrl.u32 %v71, 7
  %v73 = vsub.s32 0, %v72
  %v74 = vrot.slane %v69, %v73
  %v76 = vadd.f32 %v53, %v74
  %v77 = vadd.f32 %v54, %v74
  %v78 = vadd.f32 %v55, %v74
  %v79 = vadd.f32 %v56, %v74
  %v80 = vadd.f32 %v57, %v74
  %v81 = vadd.f32 %v58, %v74
  %v82 = vadd.f32 %v59, %v74
  %v83 = vadd.f32 %v60, %v74
  %v84 = vadd.f32 %v61, %v74
  %v85 = vadd.f32 %v62, %v74
  %v86 = vadd.f32 %v63, %v74
  %v87 = vadd.f32 %v64, %v74
  %v88 = vadd.f32 %v65, %v74
  %v89 = vadd.f32 %v66, %v74
  %v90 = vadd.f32 %v67, %v74
  %v91 = vadd.f32 %v68, %v74
  %v92 = vmax.f32 %v76, 0.0
  %v93 = vmax.f32 %v77, 0.0
  %v94 = vmax.f32 %v78, 0.0
  %v95 = vmax.f32 %v79, 0.0
  %v96 = vmax.f32 %v80, 0.0
  %v97 = vmax.f32 %v81, 0.0
  %v98 = vmax.f32 %v82, 0.0
  %v99 = vmax.f32 %v83, 0.0
  %v100 = vmax.f32 %v84, 0.0
  %v101 = vmax.f32 %v85, 0.0
  %v102 = vmax.f32 %v86, 0.0
  %v103 = vmax.f32 %v87, 0.0
  %v104 = vmax.f32 %v88, 0.0
  %v105 = vmax.f32 %v89, 0.0
  %v106 = vmax.f32 %v90, 0.0
  %v107 = vmax.f32 %v91, 0.0
  %v108 = vpack.c.bf16 %v93, %v92
  %v109 = vpack.c.bf16 %v95, %v94
  %v110 = vpack.c.bf16 %v97, %v96
  %v111 = vpack.c.bf16 %v99, %v98
  %v112 = vpack.c.bf16 %v101, %v100
  %v113 = vpack.c.bf16 %v103, %v102
  %v114 = vpack.c.bf16 %v105, %v104
  %v115 = vpack.c.bf16 %v107, %v106
  %v124 = vunpack.c.l.b16 %v108
  %v125 = vunpack.c.h.b16 %v108
  %v126 = vunpack.c.l.b16 %v109
  %v127 = vunpack.c.h.b16 %v109
  %v128 = vunpack.c.l.b16 %v110
  %v129 = vunpack.c.h.b16 %v110
  %v130 = vunpack.c.l.b16 %v111
  %v131 = vunpack.c.h.b16 %v111
  %v132 = vunpack.c.l.b16 %v112
  %v133 = vunpack.c.h.b16 %v112
  %v134 = vunpack.c.l.b16 %v113
  %v135 = vunpack.c.h.b16 %v113
  %v136 = vunpack.c.l.b16 %v114
  %v137 = vunpack.c.h.b16 %v114
  %v138 = vunpack.c.l.b16 %v115
  %v139 = vunpack.c.h.b16 %v115
  %v140 = vpack.c.b16 %v124, %v124
  %v141 = vpack.c.b16 %v125, %v125
  %v142 = vpack.c.b16 %v126, %v126
  %v143 = vpack.c.b16 %v127, %v127
  %v144 = vpack.c.b16 %v128, %v128
  %v145 = vpack.c.b16 %v129, %v129
  %v146 = vpack.c.b16 %v130, %v130
  %v147 = vpack.c.b16 %v131, %v131
  %v148 = vpack.c.b16 %v132, %v132
  %v149 = vpack.c.b16 %v133, %v133
  %v150 = vpack.c.b16 %v134, %v134
  %v151 = vpack.c.b16 %v135, %v135
  %v152 = vpack.c.b16 %v136, %v136
  %v153 = vpack.c.b16 %v137, %v137
  %v154 = vpack.c.b16 %v138, %v138
  %v155 = vpack.c.b16 %v139, %v139
  %172 = vst [vmem:[%s3] sm:$0xf] %v140
  %173 = vst [vmem:[%s3 + $0x4] sm:$0xf] %v141
  %174 = vst [vmem:[%s3 + $0x8] sm:$0xf] %v142
  %175 = vst [vmem:[%s3 + $0xc] sm:$0xf] %v143
  %176 = vst [vmem:[%s3 + $0x10] sm:$0xf] %v144
  %177 = vst [vmem:[%s3 + $0x14] sm:$0xf] %v145
  %178 = vst [vmem:[%s3 + $0x18] sm:$0xf] %v146
  %179 = vst [vmem:[%s3 + $0x1c] sm:$0xf] %v147
  %180 = vst [vmem:[%s3 + $0x20] sm:$0xf] %v148
  %181 = vst [vmem:[%s3 + $0x24] sm:$0xf] %v149
  %182 = vst [vmem:[%s3 + $0x28] sm:$0xf] %v150
  %183 = vst [vmem:[%s3 + $0x2c] sm:$0xf] %v151
  %184 = vst [vmem:[%s3 + $0x30] sm:$0xf] %v152
  %185 = vst [vmem:[%s3 + $0x34] sm:$0xf] %v153
  %186 = vst [vmem:[%s3 + $0x38] sm:$0xf] %v154
  %187 = vst [vmem:[%s3 + $0x3c] sm:$0xf] %v155
  // Predicated region
  $region14: #{graph_conv_bn.5} parent=0 // pred_check
    _
  $region15: #{graph_conv_bn.5} parent=0 // pred_check_branch
    %189 = sbr.rel (0) target = $region17
  $region16: #{graph_conv_bn.5} parent=0 // pred_region
    _
  $region17: #{graph_conv_bn.5} parent=0 // pred_fallthru
    _
  // Predicated region
  $region18: #{graph_conv_bn.5} parent=0 // pred_check
    _
  $region19: #{graph_conv_bn.5} parent=0 // pred_check_branch
    %191 = sbr.rel (0) target = $region21
  $region20: #{graph_conv_bn.5} parent=0 // pred_region
    _
  $region21: #{graph_conv_bn.5} parent=0 // pred_fallthru
    _

// kernel: graph_conv_bn.3
$region0: #{graph_conv_bn.3}
  #allocation0 [shape = 'u32[]', space=smem, size = 0x4, offset = 0x4, fixed_abs, tag = 'smem constant byte address 0x4 - core index']
  #allocation1 [shape = 'u32[144,128]{1,0:T(1,128)}', space=vmem, size = 0x12000, scoped, tag = 'internal scratch']
  %s0 = inlined_call_operand.vmem [shape: bf16[128,128], index: 0, kind: input, shape index: {}]
  %s1 = inlined_call_operand.vmem [shape: bf16[128,128], index: 1, kind: input, shape index: {}]
  %s2 = inlined_call_operand.vmem [shape: bf16[128,128], index: 2, kind: input, shape index: {}]
  %s3 = inlined_call_operand.vmem [shape: f32[1,128], index: 3, kind: input, shape index: {}]
  %s4 = inlined_call_operand.vmem [shape: bf16[128,128], index: 4, kind: output, shape index: {0}]
  %s5 = inlined_call_operand.vmem [shape: bf16[128,128], index: 5, kind: output, shape index: {1}]
  %6 = xla_tuple %s4, %s5
  %s7 = sld [smem:[#allocation0]]
  $region34: #{graph_conv_bn.3} parent=0
    _
  %s9 = ssub.s32 1, %s7
  %s10 = scalar_select 0, %s9, %s7
  // Predicated region
  $region2: #{graph_conv_bn.3} parent=0 // pred_check
    _
  $region3: #{graph_conv_bn.3} parent=0 // pred_check_branch
    %12 = sbr.rel (0) target = $region5
  $region4: #{graph_conv_bn.3} parent=0 // pred_region
    _
  $region5: #{graph_conv_bn.3} parent=0 // pred_fallthru
    _
  // Predicated region
  $region6: #{graph_conv_bn.3} parent=0 // pred_check
    _
  $region7: #{graph_conv_bn.3} parent=0 // pred_check_branch
    %14 = sbr.rel (0) target = $region9
  $region8: #{graph_conv_bn.3} parent=0 // pred_region
    _
  $region9: #{graph_conv_bn.3} parent=0 // pred_fallthru
    _
  // Predicated region
  $region10: #{graph_conv_bn.3} parent=0 // pred_check
    _
  $region11: #{graph_conv_bn.3} parent=0 // pred_check_branch
    %16 = sbr.rel (0) target = $region13
  $region12: #{graph_conv_bn.3} parent=0 // pred_region
    _
  $region13: #{graph_conv_bn.3} parent=0 // pred_fallthru
    _
  // Predicated region
  $region14: #{graph_conv_bn.3} parent=0 // pred_check
    _
  $region15: #{graph_conv_bn.3} parent=0 // pred_check_branch
    %18 = sbr.rel (0) target = $region17
  $region16: #{graph_conv_bn.3} parent=0 // pred_region
    _
  $region17: #{graph_conv_bn.3} parent=0 // pred_fallthru
    _
  %v20 = vld [vmem:[%s0] sm:$0xf]
  %v21 = vld [vmem:[%s0 + $0x4] sm:$0xf]
  %v22 = vld [vmem:[%s0 + $0x8] sm:$0xf]
  %v23 = vld [vmem:[%s0 + $0xc] sm:$0xf]
  %v24 = vld [vmem:[%s0 + $0x10] sm:$0xf]
  %v25 = vld [vmem:[%s0 + $0x14] sm:$0xf]
  %v26 = vld [vmem:[%s0 + $0x18] sm:$0xf]
  %v27 = vld [vmem:[%s0 + $0x1c] sm:$0xf]
  %v28 = vld [vmem:[%s0 + $0x20] sm:$0xf]
  %v29 = vld [vmem:[%s0 + $0x24] sm:$0xf]
  %v30 = vld [vmem:[%s0 + $0x28] sm:$0xf]
  %v31 = vld [vmem:[%s0 + $0x2c] sm:$0xf]
  %v32 = vld [vmem:[%s0 + $0x30] sm:$0xf]
  %v33 = vld [vmem:[%s0 + $0x34] sm:$0xf]
  %v34 = vld [vmem:[%s0 + $0x38] sm:$0xf]
  %v35 = vld [vmem:[%s0 + $0x3c] sm:$0xf]
  %v36 = vld [vmem:[%s1] sm:$0xf]
  %v37 = vld [vmem:[%s1 + $0x4] sm:$0xf]
  %v38 = vld [vmem:[%s1 + $0x8] sm:$0xf]
  %v39 = vld [vmem:[%s1 + $0xc] sm:$0xf]
  %v40 = vld [vmem:[%s1 + $0x10] sm:$0xf]
  %v41 = vld [vmem:[%s1 + $0x14] sm:$0xf]
  %v42 = vld [vmem:[%s1 + $0x18] sm:$0xf]
  %v43 = vld [vmem:[%s1 + $0x1c] sm:$0xf]
  %v44 = vld [vmem:[%s1 + $0x20] sm:$0xf]
  %v45 = vld [vmem:[%s1 + $0x24] sm:$0xf]
  %v46 = vld [vmem:[%s1 + $0x28] sm:$0xf]
  %v47 = vld [vmem:[%s1 + $0x2c] sm:$0xf]
  %v48 = vld [vmem:[%s1 + $0x30] sm:$0xf]
  %v49 = vld [vmem:[%s1 + $0x34] sm:$0xf]
  %v50 = vld [vmem:[%s1 + $0x38] sm:$0xf]
  %v51 = vld [vmem:[%s1 + $0x3c] sm:$0xf]
  %v68 = vunpack.c.l.b16 %v20
  %v69 = vunpack.c.l.b16 %v21
  %v70 = vunpack.c.l.b16 %v22
  %v71 = vunpack.c.l.b16 %v23
  %v72 = vunpack.c.l.b16 %v24
  %v73 = vunpack.c.l.b16 %v25
  %v74 = vunpack.c.l.b16 %v26
  %v75 = vunpack.c.l.b16 %v27
  %v76 = vunpack.c.l.b16 %v28
  %v77 = vunpack.c.l.b16 %v29
  %v78 = vunpack.c.l.b16 %v30
  %v79 = vunpack.c.l.b16 %v31
  %v80 = vunpack.c.l.b16 %v32
  %v81 = vunpack.c.l.b16 %v33
  %v82 = vunpack.c.l.b16 %v34
  %v83 = vunpack.c.l.b16 %v35
  %v84 = vpack.c.b16 %v69, %v68
  %v85 = vpack.c.b16 %v71, %v70
  %v86 = vpack.c.b16 %v73, %v72
  %v87 = vpack.c.b16 %v75, %v74
  %v88 = vpack.c.b16 %v77, %v76
  %v89 = vpack.c.b16 %v79, %v78
  %v90 = vpack.c.b16 %v81, %v80
  %v91 = vpack.c.b16 %v83, %v82
  %v116 = vunpack.c.l.b16 %v36
  %v117 = vunpack.c.l.b16 %v37
  %v118 = vunpack.c.l.b16 %v38
  %v119 = vunpack.c.l.b16 %v39
  %v120 = vunpack.c.l.b16 %v40
  %v121 = vunpack.c.l.b16 %v41
  %v122 = vunpack.c.l.b16 %v42
  %v123 = vunpack.c.l.b16 %v43
  %v124 = vunpack.c.l.b16 %v44
  %v125 = vunpack.c.l.b16 %v45
  %v126 = vunpack.c.l.b16 %v46
  %v127 = vunpack.c.l.b16 %v47
  %v128 = vunpack.c.l.b16 %v48
  %v129 = vunpack.c.l.b16 %v49
  %v130 = vunpack.c.l.b16 %v50
  %v131 = vunpack.c.l.b16 %v51
  %v132 = vpack.c.b16 %v117, %v116
  %v133 = vpack.c.b16 %v119, %v118
  %v134 = vpack.c.b16 %v121, %v120
  %v135 = vpack.c.b16 %v123, %v122
  %v136 = vpack.c.b16 %v125, %v124
  %v137 = vpack.c.b16 %v127, %v126
  %v138 = vpack.c.b16 %v129, %v128
  %v139 = vpack.c.b16 %v131, %v130
  %148 = vmatprep.subr.bf16.mxu0 0
  %149 = vmatpush1.bf16.msra.mxu0 %v139
  %150 = vmatprep.subr.bf16.mxu0 0
  %151 = vmatpush1.bf16.msra.mxu0 %v138
  %152 = vmatprep.subr.bf16.mxu0 0
  %153 = vmatpush1.bf16.msra.mxu0 %v137
  %154 = vmatprep.subr.bf16.mxu0 0
  %155 = vmatpush1.bf16.msra.mxu0 %v136
  %156 = vmatprep.subr.bf16.mxu0 0
  %157 = vmatpush1.bf16.msra.mxu0 %v135
  %158 = vmatprep.subr.bf16.mxu0 0
  %159 = vmatpush1.bf16.msra.mxu0 %v134
  %160 = vmatprep.subr.bf16.mxu0 0
  %161 = vmatpush1.bf16.msra.mxu0 %v133
  %162 = vmatprep.subr.bf16.mxu0 0
  %163 = vmatpush1.bf16.msra.mxu0 %v132
  %164 = vmatprep.subr.bf16.mxu0 0
  %165 = vmatpush2.bf16.msra.mxu0 0
  %166 = vmatprep.subr.bf16.mxu0 0
  %167 = vmatpush2.bf16.msra.mxu0 0
  %168 = vmatprep.subr.bf16.mxu0 0
  %169 = vmatpush2.bf16.msra.mxu0 0
  %170 = vmatprep.subr.bf16.mxu0 0
  %171 = vmatpush2.bf16.msra.mxu0 0
  %172 = vmatprep.subr.bf16.mxu0 0
  %173 = vmatpush2.bf16.msra.mxu0 0
  %174 = vmatprep.subr.bf16.mxu0 0
  %175 = vmatpush2.bf16.msra.mxu0 0
  %176 = vmatprep.subr.bf16.mxu0 0
  %177 = vmatpush2.bf16.msra.mxu0 0
  %178 = vmatprep.subr.bf16.mxu0 0
  %179 = vmatpush2.bf16.msra.mxu0 0
  %180 = vmatprep.mubr.bf16.mxu0 0
  %181 = vmatmul.mubr.bf16.gmra.mxu0 %v84
  %v182 = vpop.f32.mrf.mxu0
  %v183 = vadd.f32 0.0, %v182
  %v184 = vpop.f32.mrf.mxu0
  %v185 = vpop.f32.mrf.mxu0
  %v186 = vadd.f32 0.0, %v185
  %v187 = vpop.f32.mrf.mxu0
  %188 = vmatprep.mubr.bf16.mxu0 0
  %189 = vmatmul.mubr.bf16.gmra.mxu0 %v85
  %v190 = vpop.f32.mrf.mxu0
  %v191 = vadd.f32 0.0, %v190
  %v192 = vpop.f32.mrf.mxu0
  %v193 = vpop.f32.mrf.mxu0
  %v194 = vadd.f32 0.0, %v193
  %v195 = vpop.f32.mrf.mxu0
  %196 = vmatprep.mubr.bf16.mxu0 0
  %197 = vmatmul.mubr.bf16.gmra.mxu0 %v86
  %v198 = vpop.f32.mrf.mxu0
  %v199 = vadd.f32 0.0, %v198
  %v200 = vpop.f32.mrf.mxu0
  %v201 = vpop.f32.mrf.mxu0
  %v202 = vadd.f32 0.0, %v201
  %v203 = vpop.f32.mrf.mxu0
  %204 = vmatprep.mubr.bf16.mxu0 0
  %205 = vmatmul.mubr.bf16.gmra.mxu0 %v87
  %v206 = vpop.f32.mrf.mxu0
  %v207 = vadd.f32 0.0, %v206
  %v208 = vpop.f32.mrf.mxu0
  %v209 = vpop.f32.mrf.mxu0
  %v210 = vadd.f32 0.0, %v209
  %v211 = vpop.f32.mrf.mxu0
  %212 = vmatprep.mubr.bf16.mxu0 0
  %213 = vmatmul.mubr.bf16.gmra.mxu0 %v88
  %v214 = vpop.f32.mrf.mxu0
  %v215 = vadd.f32 0.0, %v214
  %v216 = vpop.f32.mrf.mxu0
  %v217 = vpop.f32.mrf.mxu0
  %v218 = vadd.f32 0.0, %v217
  %v219 = vpop.f32.mrf.mxu0
  %220 = vmatprep.mubr.bf16.mxu0 0
  %221 = vmatmul.mubr.bf16.gmra.mxu0 %v89
  %v222 = vpop.f32.mrf.mxu0
  %v223 = vadd.f32 0.0, %v222
  %v224 = vpop.f32.mrf.mxu0
  %v225 = vpop.f32.mrf.mxu0
  %v226 = vadd.f32 0.0, %v225
  %v227 = vpop.f32.mrf.mxu0
  %228 = vmatprep.mubr.bf16.mxu0 0
  %229 = vmatmul.mubr.bf16.gmra.mxu0 %v90
  %v230 = vpop.f32.mrf.mxu0
  %v231 = vadd.f32 0.0, %v230
  %v232 = vpop.f32.mrf.mxu0
  %v233 = vpop.f32.mrf.mxu0
  %v234 = vadd.f32 0.0, %v233
  %v235 = vpop.f32.mrf.mxu0
  %236 = vmatprep.mubr.bf16.mxu0 0
  %237 = vmatmul.mubr.bf16.gmra.mxu0 %v91
  %v238 = vpop.f32.mrf.mxu0
  %v239 = vadd.f32 0.0, %v238
  %v240 = vpop.f32.mrf.mxu0
  %v241 = vpop.f32.mrf.mxu0
  %v242 = vadd.f32 0.0, %v241
  %v243 = vpop.f32.mrf.mxu0
  %244 = vdwg.mxu0
  %v245 = vpack.c.bf16 %v186, %v183
  %v246 = vpack.c.bf16 %v194, %v191
  %v247 = vpack.c.bf16 %v202, %v199
  %v248 = vpack.c.bf16 %v210, %v207
  %v249 = vpack.c.bf16 %v218, %v215
  %v250 = vpack.c.bf16 %v226, %v223
  %v251 = vpack.c.bf16 %v234, %v231
  %v252 = vpack.c.bf16 %v242, %v239
  %v261 = vunpack.c.l.b16 %v245
  %v262 = vunpack.c.h.b16 %v245
  %v263 = vunpack.c.l.b16 %v246
  %v264 = vunpack.c.h.b16 %v246
  %v265 = vunpack.c.l.b16 %v247
  %v266 = vunpack.c.h.b16 %v247
  %v267 = vunpack.c.l.b16 %v248
  %v268 = vunpack.c.h.b16 %v248
  %v269 = vunpack.c.l.b16 %v249
  %v270 = vunpack.c.h.b16 %v249
  %v271 = vunpack.c.l.b16 %v250
  %v272 = vunpack.c.h.b16 %v250
  %v273 = vunpack.c.l.b16 %v251
  %v274 = vunpack.c.h.b16 %v251
  %v275 = vunpack.c.l.b16 %v252
  %v276 = vunpack.c.h.b16 %v252
  %v277 = vpack.c.b16 %v261, %v261
  %v278 = vpack.c.b16 %v262, %v262
  %v279 = vpack.c.b16 %v263, %v263
  %v280 = vpack.c.b16 %v264, %v264
  %v281 = vpack.c.b16 %v265, %v265
  %v282 = vpack.c.b16 %v266, %v266
  %v283 = vpack.c.b16 %v267, %v267
  %v284 = vpack.c.b16 %v268, %v268
  %v285 = vpack.c.b16 %v269, %v269
  %v286 = vpack.c.b16 %v270, %v270
  %v287 = vpack.c.b16 %v271, %v271
  %v288 = vpack.c.b16 %v272, %v272
  %v289 = vpack.c.b16 %v273, %v273
  %v290 = vpack.c.b16 %v274, %v274
  %v291 = vpack.c.b16 %v275, %v275
  %v292 = vpack.c.b16 %v276, %v276
  %309 = vst [vmem:[%s4] sm:$0xf] %v277
  %310 = vst [vmem:[%s4 + $0x4] sm:$0xf] %v278
  %311 = vst [vmem:[%s4 + $0x8] sm:$0xf] %v279
  %312 = vst [vmem:[%s4 + $0xc] sm:$0xf] %v280
  %313 = vst [vmem:[%s4 + $0x10] sm:$0xf] %v281
  %314 = vst [vmem:[%s4 + $0x14] sm:$0xf] %v282
  %315 = vst [vmem:[%s4 + $0x18] sm:$0xf] %v283
  %316 = vst [vmem:[%s4 + $0x1c] sm:$0xf] %v284
  %317 = vst [vmem:[%s4 + $0x20] sm:$0xf] %v285
  %318 = vst [vmem:[%s4 + $0x24] sm:$0xf] %v286
  %319 = vst [vmem:[%s4 + $0x28] sm:$0xf] %v287
  %320 = vst [vmem:[%s4 + $0x2c] sm:$0xf] %v288
  %321 = vst [vmem:[%s4 + $0x30] sm:$0xf] %v289
  %322 = vst [vmem:[%s4 + $0x34] sm:$0xf] %v290
  %323 = vst [vmem:[%s4 + $0x38] sm:$0xf] %v291
  %324 = vst [vmem:[%s4 + $0x3c] sm:$0xf] %v292
  %v325 = vld [vmem:[%s2] sm:$0xf]
  %v326 = vld [vmem:[%s2 + $0x4] sm:$0xf]
  %v327 = vld [vmem:[%s2 + $0x8] sm:$0xf]
  %v328 = vld [vmem:[%s2 + $0xc] sm:$0xf]
  %v329 = vld [vmem:[%s2 + $0x10] sm:$0xf]
  %v330 = vld [vmem:[%s2 + $0x14] sm:$0xf]
  %v331 = vld [vmem:[%s2 + $0x18] sm:$0xf]
  %v332 = vld [vmem:[%s2 + $0x1c] sm:$0xf]
  %v333 = vld [vmem:[%s2 + $0x20] sm:$0xf]
  %v334 = vld [vmem:[%s2 + $0x24] sm:$0xf]
  %v335 = vld [vmem:[%s2 + $0x28] sm:$0xf]
  %v336 = vld [vmem:[%s2 + $0x2c] sm:$0xf]
  %v337 = vld [vmem:[%s2 + $0x30] sm:$0xf]
  %v338 = vld [vmem:[%s2 + $0x34] sm:$0xf]
  %v339 = vld [vmem:[%s2 + $0x38] sm:$0xf]
  %v340 = vld [vmem:[%s2 + $0x3c] sm:$0xf]
  %v341 = vld [vmem:[%s3] sm:$0x1]
  %v343 = vlaneseq
  %v344 = vshrl.u32 %v343, 7
  %v345 = vsub.s32 0, %v344
  %v346 = vrot.slane %v341, %v345
  %v364 = vunpack.c.l.b16 %v325
  %v365 = vunpack.c.l.b16 %v326
  %v366 = vunpack.c.l.b16 %v327
  %v367 = vunpack.c.l.b16 %v328
  %v368 = vunpack.c.l.b16 %v329
  %v369 = vunpack.c.l.b16 %v330
  %v370 = vunpack.c.l.b16 %v331
  %v371 = vunpack.c.l.b16 %v332
  %v372 = vunpack.c.l.b16 %v333
  %v373 = vunpack.c.l.b16 %v334
  %v374 = vunpack.c.l.b16 %v335
  %v375 = vunpack.c.l.b16 %v336
  %v376 = vunpack.c.l.b16 %v337
  %v377 = vunpack.c.l.b16 %v338
  %v378 = vunpack.c.l.b16 %v339
  %v379 = vunpack.c.l.b16 %v340
  %v380 = vpack.c.b16 %v365, %v364
  %v381 = vpack.c.b16 %v367, %v366
  %v382 = vpack.c.b16 %v369, %v368
  %v383 = vpack.c.b16 %v371, %v370
  %v384 = vpack.c.b16 %v373, %v372
  %v385 = vpack.c.b16 %v375, %v374
  %v386 = vpack.c.b16 %v377, %v376
  %v387 = vpack.c.b16 %v379, %v378
  %396 = vmatprep.subr.bf16.mxu0 0
  %397 = vmatpush1.bf16.msra.mxu0 %v387
  %398 = vmatprep.subr.bf16.mxu0 0
  %399 = vmatpush1.bf16.msra.mxu0 %v386
  %400 = vmatprep.subr.bf16.mxu0 0
  %401 = vmatpush1.bf16.msra.mxu0 %v385
  %402 = vmatprep.subr.bf16.mxu0 0
  %403 = vmatpush1.bf16.msra.mxu0 %v384
  %404 = vmatprep.subr.bf16.mxu0 0
  %405 = vmatpush1.bf16.msra.mxu0 %v383
  %406 = vmatprep.subr.bf16.mxu0 0
  %407 = vmatpush1.bf16.msra.mxu0 %v382
  %408 = vmatprep.subr.bf16.mxu0 0
  %409 = vmatpush1.bf16.msra.mxu0 %v381
  %410 = vmatprep.subr.bf16.mxu0 0
  %411 = vmatpush1.bf16.msra.mxu0 %v380
  %412 = vmatprep.subr.bf16.mxu0 0
  %413 = vmatpush2.bf16.msra.mxu0 0
  %414 = vmatprep.subr.bf16.mxu0 0
  %415 = vmatpush2.bf16.msra.mxu0 0
  %416 = vmatprep.subr.bf16.mxu0 0
  %417 = vmatpush2.bf16.msra.mxu0 0
  %418 = vmatprep.subr.bf16.mxu0 0
  %419 = vmatpush2.bf16.msra.mxu0 0
  %420 = vmatprep.subr.bf16.mxu0 0
  %421 = vmatpush2.bf16.msra.mxu0 0
  %422 = vmatprep.subr.bf16.mxu0 0
  %423 = vmatpush2.bf16.msra.mxu0 0
  %424 = vmatprep.subr.bf16.mxu0 0
  %425 = vmatpush2.bf16.msra.mxu0 0
  %426 = vmatprep.subr.bf16.mxu0 0
  %427 = vmatpush2.bf16.msra.mxu0 0
  %428 = vmatprep.mubr.bf16.mxu0 0
  %429 = vmatmul.mubr.bf16.gmra.mxu0 %v84
  %v430 = vpop.f32.mrf.mxu0
  %v431 = vadd.f32 %v346, %v430
  %v432 = vpop.f32.mrf.mxu0
  %v433 = vpop.f32.mrf.mxu0
  %v434 = vadd.f32 %v346, %v433
  %v435 = vpop.f32.mrf.mxu0
  %436 = vmatprep.mubr.bf16.mxu0 0
  %437 = vmatmul.mubr.bf16.gmra.mxu0 %v85
  %v438 = vpop.f32.mrf.mxu0
  %v439 = vadd.f32 %v346, %v438
  %v440 = vpop.f32.mrf.mxu0
  %v441 = vpop.f32.mrf.mxu0
  %v442 = vadd.f32 %v346, %v441
  %v443 = vpop.f32.mrf.mxu0
  %444 = vmatprep.mubr.bf16.mxu0 0
  %445 = vmatmul.mubr.bf16.gmra.mxu0 %v86
  %v446 = vpop.f32.mrf.mxu0
  %v447 = vadd.f32 %v346, %v446
  %v448 = vpop.f32.mrf.mxu0
  %v449 = vpop.f32.mrf.mxu0
  %v450 = vadd.f32 %v346, %v449
  %v451 = vpop.f32.mrf.mxu0
  %452 = vmatprep.mubr.bf16.mxu0 0
  %453 = vmatmul.mubr.bf16.gmra.mxu0 %v87
  %v454 = vpop.f32.mrf.mxu0
  %v455 = vadd.f32 %v346, %v454
  %v456 = vpop.f32.mrf.mxu0
  %v457 = vpop.f32.mrf.mxu0
  %v458 = vadd.f32 %v346, %v457
  %v459 = vpop.f32.mrf.mxu0
  %460 = vmatprep.mubr.bf16.mxu0 0
  %461 = vmatmul.mubr.bf16.gmra.mxu0 %v88
  %v462 = vpop.f32.mrf.mxu0
  %v463 = vadd.f32 %v346, %v462
  %v464 = vpop.f32.mrf.mxu0
  %v465 = vpop.f32.mrf.mxu0
  %v466 = vadd.f32 %v346, %v465
  %v467 = vpop.f32.mrf.mxu0
  %468 = vmatprep.mubr.bf16.mxu0 0
  %469 = vmatmul.mubr.bf16.gmra.mxu0 %v89
  %v470 = vpop.f32.mrf.mxu0
  %v471 = vadd.f32 %v346, %v470
  %v472 = vpop.f32.mrf.mxu0
  %v473 = vpop.f32.mrf.mxu0
  %v474 = vadd.f32 %v346, %v473
  %v475 = vpop.f32.mrf.mxu0
  %476 = vmatprep.mubr.bf16.mxu0 0
  %477 = vmatmul.mubr.bf16.gmra.mxu0 %v90
  %v478 = vpop.f32.mrf.mxu0
  %v479 = vadd.f32 %v346, %v478
  %v480 = vpop.f32.mrf.mxu0
  %v481 = vpop.f32.mrf.mxu0
  %v482 = vadd.f32 %v346, %v481
  %v483 = vpop.f32.mrf.mxu0
  %484 = vmatprep.mubr.bf16.mxu0 0
  %485 = vmatmul.mubr.bf16.gmra.mxu0 %v91
  %v486 = vpop.f32.mrf.mxu0
  %v487 = vadd.f32 %v346, %v486
  %v488 = vpop.f32.mrf.mxu0
  %v489 = vpop.f32.mrf.mxu0
  %v490 = vadd.f32 %v346, %v489
  %v491 = vpop.f32.mrf.mxu0
  %492 = vdwg.mxu0
  %v493 = vpack.c.bf16 %v434, %v431
  %v494 = vpack.c.bf16 %v442, %v439
  %v495 = vpack.c.bf16 %v450, %v447
  %v496 = vpack.c.bf16 %v458, %v455
  %v497 = vpack.c.bf16 %v466, %v463
  %v498 = vpack.c.bf16 %v474, %v471
  %v499 = vpack.c.bf16 %v482, %v479
  %v500 = vpack.c.bf16 %v490, %v487
  %v509 = vunpack.c.l.b16 %v493
  %v510 = vunpack.c.h.b16 %v493
  %v511 = vunpack.c.l.b16 %v494
  %v512 = vunpack.c.h.b16 %v494
  %v513 = vunpack.c.l.b16 %v495
  %v514 = vunpack.c.h.b16 %v495
  %v515 = vunpack.c.l.b16 %v496
  %v516 = vunpack.c.h.b16 %v496
  %v517 = vunpack.c.l.b16 %v497
  %v518 = vunpack.c.h.b16 %v497
  %v519 = vunpack.c.l.b16 %v498
  %v520 = vunpack.c.h.b16 %v498
  %v521 = vunpack.c.l.b16 %v499
  %v522 = vunpack.c.h.b16 %v499
  %v523 = vunpack.c.l.b16 %v500
  %v524 = vunpack.c.h.b16 %v500
  %v525 = vpack.c.b16 %v509, %v509
  %v526 = vpack.c.b16 %v510, %v510
  %v527 = vpack.c.b16 %v511, %v511
  %v528 = vpack.c.b16 %v512, %v512
  %v529 = vpack.c.b16 %v513, %v513
  %v530 = vpack.c.b16 %v514, %v514
  %v531 = vpack.c.b16 %v515, %v515
  %v532 = vpack.c.b16 %v516, %v516
  %v533 = vpack.c.b16 %v517, %v517
  %v534 = vpack.c.b16 %v518, %v518
  %v535 = vpack.c.b16 %v519, %v519
  %v536 = vpack.c.b16 %v520, %v520
  %v537 = vpack.c.b16 %v521, %v521
  %v538 = vpack.c.b16 %v522, %v522
  %v539 = vpack.c.b16 %v523, %v523
  %v540 = vpack.c.b16 %v524, %v524
  %557 = vst [vmem:[%s5] sm:$0xf] %v525
  %558 = vst [vmem:[%s5 + $0x4] sm:$0xf] %v526
  %559 = vst [vmem:[%s5 + $0x8] sm:$0xf] %v527
  %560 = vst [vmem:[%s5 + $0xc] sm:$0xf] %v528
  %561 = vst [vmem:[%s5 + $0x10] sm:$0xf] %v529
  %562 = vst [vmem:[%s5 + $0x14] sm:$0xf] %v530
  %563 = vst [vmem:[%s5 + $0x18] sm:$0xf] %v531
  %564 = vst [vmem:[%s5 + $0x1c] sm:$0xf] %v532
  %565 = vst [vmem:[%s5 + $0x20] sm:$0xf] %v533
  %566 = vst [vmem:[%s5 + $0x24] sm:$0xf] %v534
  %567 = vst [vmem:[%s5 + $0x28] sm:$0xf] %v535
  %568 = vst [vmem:[%s5 + $0x2c] sm:$0xf] %v536
  %569 = vst [vmem:[%s5 + $0x30] sm:$0xf] %v537
  %570 = vst [vmem:[%s5 + $0x34] sm:$0xf] %v538
  %571 = vst [vmem:[%s5 + $0x38] sm:$0xf] %v539
  %572 = vst [vmem:[%s5 + $0x3c] sm:$0xf] %v540
  // Predicated region
  $region18: #{graph_conv_bn.3} parent=0 // pred_check
    _
  $region19: #{graph_conv_bn.3} parent=0 // pred_check_branch
    %574 = sbr.rel (0) target = $region21
  $region20: #{graph_conv_bn.3} parent=0 // pred_region
    _
  $region21: #{graph_conv_bn.3} parent=0 // pred_fallthru
    _
  // Predicated region
  $region22: #{graph_conv_bn.3} parent=0 // pred_check
    _
  $region23: #{graph_conv_bn.3} parent=0 // pred_check_branch
    %576 = sbr.rel (0) target = $region25
  $region24: #{graph_conv_bn.3} parent=0 // pred_region
    _
  $region25: #{graph_conv_bn.3} parent=0 // pred_fallthru
    _
  // Predicated region
  $region26: #{graph_conv_bn.3} parent=0 // pred_check
    _
  $region27: #{graph_conv_bn.3} parent=0 // pred_check_branch
    %578 = sbr.rel (0) target = $region29
  $region28: #{graph_conv_bn.3} parent=0 // pred_region
    _
  $region29: #{graph_conv_bn.3} parent=0 // pred_fallthru
    _
  // Predicated region
  $region30: #{graph_conv_bn.3} parent=0 // pred_check
    _
  $region31: #{graph_conv_bn.3} parent=0 // pred_check_branch
    %580 = sbr.rel (0) target = $region33
  $region32: #{graph_conv_bn.3} parent=0 // pred_region
    _
  $region33: #{graph_conv_bn.3} parent=0 // pred_fallthru
    _

// kernel: graph_conv_bn.4
$region0: #{graph_conv_bn.4}
  #allocation0 [shape = 'u32[]', space=smem, size = 0x4, offset = 0x4, fixed_abs, tag = 'smem constant byte address 0x4 - core index']
  #allocation1 [shape = 'u32[144,128]{1,0:T(1,128)}', space=vmem, size = 0x12000, scoped, tag = 'internal scratch']
  #allocation2 [shape = 'f32[128,128]{1,0:T(8,128)}', space=vmem, size = 0x10000, scoped, tag = 'scratch operand']
  %s0 = inlined_call_operand.vmem [shape: bf16[128,128], index: 0, kind: input, shape index: {}]
  %s1 = inlined_call_operand.vmem [shape: bf16[128,128], index: 1, kind: input, shape index: {}]
  %s2 = inlined_call_operand.vmem [shape: bf16[128,128], index: 2, kind: input, shape index: {}]
  %s3 = inlined_call_operand.vmem [shape: bf16[128,128], index: 3, kind: output, shape index: {0}]
  %s4 = inlined_call_operand.vmem [shape: f32[1,2,128], index: 4, kind: output, shape index: {1}]
  %5 = xla_tuple %s3, %s4
  %s6 = sld [smem:[#allocation0]]
  $region38: #{graph_conv_bn.4} parent=0
    _
  %s8 = ssub.s32 1, %s6
  %s9 = scalar_select 0, %s8, %s6
  // Predicated region
  $region2: #{graph_conv_bn.4} parent=0 // pred_check
    _
  $region3: #{graph_conv_bn.4} parent=0 // pred_check_branch
    %11 = sbr.rel (0) target = $region5
  $region4: #{graph_conv_bn.4} parent=0 // pred_region
    _
  $region5: #{graph_conv_bn.4} parent=0 // pred_fallthru
    _
  // Predicated region
  $region6: #{graph_conv_bn.4} parent=0 // pred_check
    _
  $region7: #{graph_conv_bn.4} parent=0 // pred_check_branch
    %13 = sbr.rel (0) target = $region9
  $region8: #{graph_conv_bn.4} parent=0 // pred_region
    _
  $region9: #{graph_conv_bn.4} parent=0 // pred_fallthru
    _
  // Predicated region
  $region10: #{graph_conv_bn.4} parent=0 // pred_check
    _
  $region11: #{graph_conv_bn.4} parent=0 // pred_check_branch
    %15 = sbr.rel (0) target = $region13
  $region12: #{graph_conv_bn.4} parent=0 // pred_region
    _
  $region13: #{graph_conv_bn.4} parent=0 // pred_fallthru
    _
  %p17 = scmp.eq.s32.totalorder 0, 0
  // Predicated region
  $region14: #{graph_conv_bn.4} parent=0 // pred_check
    %p18 = pneg %p17
  $region15: #{graph_conv_bn.4} parent=0 // pred_check_branch
    %20 = sbr.rel (%p18) target = $region17
  $region16: #{graph_conv_bn.4} parent=0 // pred_region
    %v21 = vld [vmem:[%s2] sm:$0xf]
    %v22 = vld [vmem:[%s2 + $0x4] sm:$0xf]
    %v23 = vld [vmem:[%s2 + $0x8] sm:$0xf]
    %v24 = vld [vmem:[%s2 + $0xc] sm:$0xf]
    %v25 = vld [vmem:[%s2 + $0x10] sm:$0xf]
    %v26 = vld [vmem:[%s2 + $0x14] sm:$0xf]
    %v27 = vld [vmem:[%s2 + $0x18] sm:$0xf]
    %v28 = vld [vmem:[%s2 + $0x1c] sm:$0xf]
    %v29 = vld [vmem:[%s2 + $0x20] sm:$0xf]
    %v30 = vld [vmem:[%s2 + $0x24] sm:$0xf]
    %v31 = vld [vmem:[%s2 + $0x28] sm:$0xf]
    %v32 = vld [vmem:[%s2 + $0x2c] sm:$0xf]
    %v33 = vld [vmem:[%s2 + $0x30] sm:$0xf]
    %v34 = vld [vmem:[%s2 + $0x34] sm:$0xf]
    %v35 = vld [vmem:[%s2 + $0x38] sm:$0xf]
    %v36 = vld [vmem:[%s2 + $0x3c] sm:$0xf]
    %v37 = vunpack.c.l.bf16 %v21
    %v38 = vunpack.c.l.bf16 %v22
    %v39 = vunpack.c.l.bf16 %v23
    %v40 = vunpack.c.l.bf16 %v24
    %v41 = vunpack.c.l.bf16 %v25
    %v42 = vunpack.c.l.bf16 %v26
    %v43 = vunpack.c.l.bf16 %v27
    %v44 = vunpack.c.l.bf16 %v28
    %v45 = vunpack.c.l.bf16 %v29
    %v46 = vunpack.c.l.bf16 %v30
    %v47 = vunpack.c.l.bf16 %v31
    %v48 = vunpack.c.l.bf16 %v32
    %v49 = vunpack.c.l.bf16 %v33
    %v50 = vunpack.c.l.bf16 %v34
    %v51 = vunpack.c.l.bf16 %v35
    %v52 = vunpack.c.l.bf16 %v36
    %53 = vst [vmem:[#allocation2] sm:$0xff] %v37
    %54 = vst [vmem:[#allocation2 + $0x8] sm:$0xff] %v38
    %55 = vst [vmem:[#allocation2 + $0x10] sm:$0xff] %v39
    %56 = vst [vmem:[#allocation2 + $0x18] sm:$0xff] %v40
    %57 = vst [vmem:[#allocation2 + $0x20] sm:$0xff] %v41
    %58 = vst [vmem:[#allocation2 + $0x28] sm:$0xff] %v42
    %59 = vst [vmem:[#allocation2 + $0x30] sm:$0xff] %v43
    %60 = vst [vmem:[#allocation2 + $0x38] sm:$0xff] %v44
    %61 = vst [vmem:[#allocation2 + $0x40] sm:$0xff] %v45
    %62 = vst [vmem:[#allocation2 + $0x48] sm:$0xff] %v46
    %63 = vst [vmem:[#allocation2 + $0x50] sm:$0xff] %v47
    %64 = vst [vmem:[#allocation2 + $0x58] sm:$0xff] %v48
    %65 = vst [vmem:[#allocation2 + $0x60] sm:$0xff] %v49
    %66 = vst [vmem:[#allocation2 + $0x68] sm:$0xff] %v50
    %67 = vst [vmem:[#allocation2 + $0x70] sm:$0xff] %v51
    %68 = vst [vmem:[#allocation2 + $0x78] sm:$0xff] %v52
  $region17: #{graph_conv_bn.4} parent=0 // pred_fallthru
    _
  %v69 = vld [vmem:[#allocation2] sm:$0xff]
  %v70 = vld [vmem:[#allocation2 + $0x8] sm:$0xff]
  %v71 = vld [vmem:[#allocation2 + $0x10] sm:$0xff]
  %v72 = vld [vmem:[#allocation2 + $0x18] sm:$0xff]
  %v73 = vld [vmem:[#allocation2 + $0x20] sm:$0xff]
  %v74 = vld [vmem:[#allocation2 + $0x28] sm:$0xff]
  %v75 = vld [vmem:[#allocation2 + $0x30] sm:$0xff]
  %v76 = vld [vmem:[#allocation2 + $0x38] sm:$0xff]
  %v77 = vld [vmem:[#allocation2 + $0x40] sm:$0xff]
  %v78 = vld [vmem:[#allocation2 + $0x48] sm:$0xff]
  %v79 = vld [vmem:[#allocation2 + $0x50] sm:$0xff]
  %v80 = vld [vmem:[#allocation2 + $0x58] sm:$0xff]
  %v81 = vld [vmem:[#allocation2 + $0x60] sm:$0xff]
  %v82 = vld [vmem:[#allocation2 + $0x68] sm:$0xff]
  %v83 = vld [vmem:[#allocation2 + $0x70] sm:$0xff]
  %v84 = vld [vmem:[#allocation2 + $0x78] sm:$0xff]
  %v85 = vld [vmem:[%s0] sm:$0xf]
  %v86 = vld [vmem:[%s0 + $0x4] sm:$0xf]
  %v87 = vld [vmem:[%s0 + $0x8] sm:$0xf]
  %v88 = vld [vmem:[%s0 + $0xc] sm:$0xf]
  %v89 = vld [vmem:[%s0 + $0x10] sm:$0xf]
  %v90 = vld [vmem:[%s0 + $0x14] sm:$0xf]
  %v91 = vld [vmem:[%s0 + $0x18] sm:$0xf]
  %v92 = vld [vmem:[%s0 + $0x1c] sm:$0xf]
  %v93 = vld [vmem:[%s0 + $0x20] sm:$0xf]
  %v94 = vld [vmem:[%s0 + $0x24] sm:$0xf]
  %v95 = vld [vmem:[%s0 + $0x28] sm:$0xf]
  %v96 = vld [vmem:[%s0 + $0x2c] sm:$0xf]
  %v97 = vld [vmem:[%s0 + $0x30] sm:$0xf]
  %v98 = vld [vmem:[%s0 + $0x34] sm:$0xf]
  %v99 = vld [vmem:[%s0 + $0x38] sm:$0xf]
  %v100 = vld [vmem:[%s0 + $0x3c] sm:$0xf]
  %v101 = vld [vmem:[%s1] sm:$0xf]
  %v102 = vld [vmem:[%s1 + $0x4] sm:$0xf]
  %v103 = vld [vmem:[%s1 + $0x8] sm:$0xf]
  %v104 = vld [vmem:[%s1 + $0xc] sm:$0xf]
  %v105 = vld [vmem:[%s1 + $0x10] sm:$0xf]
  %v106 = vld [vmem:[%s1 + $0x14] sm:$0xf]
  %v107 = vld [vmem:[%s1 + $0x18] sm:$0xf]
  %v108 = vld [vmem:[%s1 + $0x1c] sm:$0xf]
  %v109 = vld [vmem:[%s1 + $0x20] sm:$0xf]
  %v110 = vld [vmem:[%s1 + $0x24] sm:$0xf]
  %v111 = vld [vmem:[%s1 + $0x28] sm:$0xf]
  %v112 = vld [vmem:[%s1 + $0x2c] sm:$0xf]
  %v113 = vld [vmem:[%s1 + $0x30] sm:$0xf]
  %v114 = vld [vmem:[%s1 + $0x34] sm:$0xf]
  %v115 = vld [vmem:[%s1 + $0x38] sm:$0xf]
  %v116 = vld [vmem:[%s1 + $0x3c] sm:$0xf]
  %v133 = vunpack.c.l.b16 %v85
  %v134 = vunpack.c.l.b16 %v86
  %v135 = vunpack.c.l.b16 %v87
  %v136 = vunpack.c.l.b16 %v88
  %v137 = vunpack.c.l.b16 %v89
  %v138 = vunpack.c.l.b16 %v90
  %v139 = vunpack.c.l.b16 %v91
  %v140 = vunpack.c.l.b16 %v92
  %v141 = vunpack.c.l.b16 %v93
  %v142 = vunpack.c.l.b16 %v94
  %v143 = vunpack.c.l.b16 %v95
  %v144 = vunpack.c.l.b16 %v96
  %v145 = vunpack.c.l.b16 %v97
  %v146 = vunpack.c.l.b16 %v98
  %v147 = vunpack.c.l.b16 %v99
  %v148 = vunpack.c.l.b16 %v100
  %v149 = vpack.c.b16 %v134, %v133
  %v150 = vpack.c.b16 %v136, %v135
  %v151 = vpack.c.b16 %v138, %v137
  %v152 = vpack.c.b16 %v140, %v139
  %v153 = vpack.c.b16 %v142, %v141
  %v154 = vpack.c.b16 %v144, %v143
  %v155 = vpack.c.b16 %v146, %v145
  %v156 = vpack.c.b16 %v148, %v147
  %v181 = vunpack.c.l.b16 %v101
  %v182 = vunpack.c.l.b16 %v102
  %v183 = vunpack.c.l.b16 %v103
  %v184 = vunpack.c.l.b16 %v104
  %v185 = vunpack.c.l.b16 %v105
  %v186 = vunpack.c.l.b16 %v106
  %v187 = vunpack.c.l.b16 %v107
  %v188 = vunpack.c.l.b16 %v108
  %v189 = vunpack.c.l.b16 %v109
  %v190 = vunpack.c.l.b16 %v110
  %v191 = vunpack.c.l.b16 %v111
  %v192 = vunpack.c.l.b16 %v112
  %v193 = vunpack.c.l.b16 %v113
  %v194 = vunpack.c.l.b16 %v114
  %v195 = vunpack.c.l.b16 %v115
  %v196 = vunpack.c.l.b16 %v116
  %v197 = vpack.c.b16 %v182, %v181
  %v198 = vpack.c.b16 %v184, %v183
  %v199 = vpack.c.b16 %v186, %v185
  %v200 = vpack.c.b16 %v188, %v187
  %v201 = vpack.c.b16 %v190, %v189
  %v202 = vpack.c.b16 %v192, %v191
  %v203 = vpack.c.b16 %v194, %v193
  %v204 = vpack.c.b16 %v196, %v195
  %213 = vmatprep.subr.bf16.mxu0 0
  %214 = vmatpush1.bf16.msra.mxu0 %v204
  %215 = vmatprep.subr.bf16.mxu0 0
  %216 = vmatpush1.bf16.msra.mxu0 %v203
  %217 = vmatprep.subr.bf16.mxu0 0
  %218 = vmatpush1.bf16.msra.mxu0 %v202
  %219 = vmatprep.subr.bf16.mxu0 0
  %220 = vmatpush1.bf16.msra.mxu0 %v201
  %221 = vmatprep.subr.bf16.mxu0 0
  %222 = vmatpush1.bf16.msra.mxu0 %v200
  %223 = vmatprep.subr.bf16.mxu0 0
  %224 = vmatpush1.bf16.msra.mxu0 %v199
  %225 = vmatprep.subr.bf16.mxu0 0
  %226 = vmatpush1.bf16.msra.mxu0 %v198
  %227 = vmatprep.subr.bf16.mxu0 0
  %228 = vmatpush1.bf16.msra.mxu0 %v197
  %229 = vmatprep.subr.bf16.mxu0 0
  %230 = vmatpush2.bf16.msra.mxu0 0
  %231 = vmatprep.subr.bf16.mxu0 0
  %232 = vmatpush2.bf16.msra.mxu0 0
  %233 = vmatprep.subr.bf16.mxu0 0
  %234 = vmatpush2.bf16.msra.mxu0 0
  %235 = vmatprep.subr.bf16.mxu0 0
  %236 = vmatpush2.bf16.msra.mxu0 0
  %237 = vmatprep.subr.bf16.mxu0 0
  %238 = vmatpush2.bf16.msra.mxu0 0
  %239 = vmatprep.subr.bf16.mxu0 0
  %240 = vmatpush2.bf16.msra.mxu0 0
  %241 = vmatprep.subr.bf16.mxu0 0
  %242 = vmatpush2.bf16.msra.mxu0 0
  %243 = vmatprep.subr.bf16.mxu0 0
  %244 = vmatpush2.bf16.msra.mxu0 0
  %245 = vmatprep.mubr.bf16.mxu0 0
  %246 = vmatmul.mubr.bf16.gmra.mxu0 %v149
  %v247 = vpop.f32.mrf.mxu0
  %v248 = vadd.f32 0.0, %v247
  %v249 = vpop.f32.mrf.mxu0
  %v250 = vpop.f32.mrf.mxu0
  %v251 = vadd.f32 0.0, %v250
  %v252 = vpop.f32.mrf.mxu0
  %253 = vmatprep.mubr.bf16.mxu0 0
  %254 = vmatmul.mubr.bf16.gmra.mxu0 %v150
  %v255 = vpop.f32.mrf.mxu0
  %v256 = vadd.f32 0.0, %v255
  %v257 = vpop.f32.mrf.mxu0
  %v258 = vpop.f32.mrf.mxu0
  %v259 = vadd.f32 0.0, %v258
  %v260 = vpop.f32.mrf.mxu0
  %261 = vmatprep.mubr.bf16.mxu0 0
  %262 = vmatmul.mubr.bf16.gmra.mxu0 %v151
  %v263 = vpop.f32.mrf.mxu0
  %v264 = vadd.f32 0.0, %v263
  %v265 = vpop.f32.mrf.mxu0
  %v266 = vpop.f32.mrf.mxu0
  %v267 = vadd.f32 0.0, %v266
  %v268 = vpop.f32.mrf.mxu0
  %269 = vmatprep.mubr.bf16.mxu0 0
  %270 = vmatmul.mubr.bf16.gmra.mxu0 %v152
  %v271 = vpop.f32.mrf.mxu0
  %v272 = vadd.f32 0.0, %v271
  %v273 = vpop.f32.mrf.mxu0
  %v274 = vpop.f32.mrf.mxu0
  %v275 = vadd.f32 0.0, %v274
  %v276 = vpop.f32.mrf.mxu0
  %277 = vmatprep.mubr.bf16.mxu0 0
  %278 = vmatmul.mubr.bf16.gmra.mxu0 %v153
  %v279 = vpop.f32.mrf.mxu0
  %v280 = vadd.f32 0.0, %v279
  %v281 = vpop.f32.mrf.mxu0
  %v282 = vpop.f32.mrf.mxu0
  %v283 = vadd.f32 0.0, %v282
  %v284 = vpop.f32.mrf.mxu0
  %285 = vmatprep.mubr.bf16.mxu0 0
  %286 = vmatmul.mubr.bf16.gmra.mxu0 %v154
  %v287 = vpop.f32.mrf.mxu0
  %v288 = vadd.f32 0.0, %v287
  %v289 = vpop.f32.mrf.mxu0
  %v290 = vpop.f32.mrf.mxu0
  %v291 = vadd.f32 0.0, %v290
  %v292 = vpop.f32.mrf.mxu0
  %293 = vmatprep.mubr.bf16.mxu0 0
  %294 = vmatmul.mubr.bf16.gmra.mxu0 %v155
  %v295 = vpop.f32.mrf.mxu0
  %v296 = vadd.f32 0.0, %v295
  %v297 = vpop.f32.mrf.mxu0
  %v298 = vpop.f32.mrf.mxu0
  %v299 = vadd.f32 0.0, %v298
  %v300 = vpop.f32.mrf.mxu0
  %301 = vmatprep.mubr.bf16.mxu0 0
  %302 = vmatmul.mubr.bf16.gmra.mxu0 %v156
  %v303 = vpop.f32.mrf.mxu0
  %v304 = vadd.f32 0.0, %v303
  %v305 = vpop.f32.mrf.mxu0
  %v306 = vpop.f32.mrf.mxu0
  %v307 = vadd.f32 0.0, %v306
  %v308 = vpop.f32.mrf.mxu0
  %309 = vdwg.mxu0
  %v310 = vadd.f32 %v69, %v248
  %v311 = vadd.f32 %v70, %v251
  %v312 = vadd.f32 %v71, %v256
  %v313 = vadd.f32 %v72, %v259
  %v314 = vadd.f32 %v73, %v264
  %v315 = vadd.f32 %v74, %v267
  %v316 = vadd.f32 %v75, %v272
  %v317 = vadd.f32 %v76, %v275
  %v318 = vadd.f32 %v77, %v280
  %v319 = vadd.f32 %v78, %v283
  %v320 = vadd.f32 %v79, %v288
  %v321 = vadd.f32 %v80, %v291
  %v322 = vadd.f32 %v81, %v296
  %v323 = vadd.f32 %v82, %v299
  %v324 = vadd.f32 %v83, %v304
  %v325 = vadd.f32 %v84, %v307
  %326 = vst [vmem:[#allocation2] sm:$0xff] %v310
  %327 = vst [vmem:[#allocation2 + $0x8] sm:$0xff] %v311
  %328 = vst [vmem:[#allocation2 + $0x10] sm:$0xff] %v312
  %329 = vst [vmem:[#allocation2 + $0x18] sm:$0xff] %v313
  %330 = vst [vmem:[#allocation2 + $0x20] sm:$0xff] %v314
  %331 = vst [vmem:[#allocation2 + $0x28] sm:$0xff] %v315
  %332 = vst [vmem:[#allocation2 + $0x30] sm:$0xff] %v316
  %333 = vst [vmem:[#allocation2 + $0x38] sm:$0xff] %v317
  %334 = vst [vmem:[#allocation2 + $0x40] sm:$0xff] %v318
  %335 = vst [vmem:[#allocation2 + $0x48] sm:$0xff] %v319
  %336 = vst [vmem:[#allocation2 + $0x50] sm:$0xff] %v320
  %337 = vst [vmem:[#allocation2 + $0x58] sm:$0xff] %v321
  %338 = vst [vmem:[#allocation2 + $0x60] sm:$0xff] %v322
  %339 = vst [vmem:[#allocation2 + $0x68] sm:$0xff] %v323
  %340 = vst [vmem:[#allocation2 + $0x70] sm:$0xff] %v324
  %341 = vst [vmem:[#allocation2 + $0x78] sm:$0xff] %v325
  // Predicated region
  $region18: #{graph_conv_bn.4} parent=0 // pred_check
    %p342 = pneg %p17
  $region19: #{graph_conv_bn.4} parent=0 // pred_check_branch
    %344 = sbr.rel (%p342) target = $region21
  $region20: #{graph_conv_bn.4} parent=0 // pred_region
    %v345 = vld [vmem:[#allocation2] sm:$0xff]
    %v346 = vld [vmem:[#allocation2 + $0x8] sm:$0xff]
    %v347 = vld [vmem:[#allocation2 + $0x10] sm:$0xff]
    %v348 = vld [vmem:[#allocation2 + $0x18] sm:$0xff]
    %v349 = vld [vmem:[#allocation2 + $0x20] sm:$0xff]
    %v350 = vld [vmem:[#allocation2 + $0x28] sm:$0xff]
    %v351 = vld [vmem:[#allocation2 + $0x30] sm:$0xff]
    %v352 = vld [vmem:[#allocation2 + $0x38] sm:$0xff]
    %v353 = vld [vmem:[#allocation2 + $0x40] sm:$0xff]
    %v354 = vld [vmem:[#allocation2 + $0x48] sm:$0xff]
    %v355 = vld [vmem:[#allocation2 + $0x50] sm:$0xff]
    %v356 = vld [vmem:[#allocation2 + $0x58] sm:$0xff]
    %v357 = vld [vmem:[#allocation2 + $0x60] sm:$0xff]
    %v358 = vld [vmem:[#allocation2 + $0x68] sm:$0xff]
    %v359 = vld [vmem:[#allocation2 + $0x70] sm:$0xff]
    %v360 = vld [vmem:[#allocation2 + $0x78] sm:$0xff]
    %v361 = vpack.c.bf16 %v346, %v345
    %v362 = vpack.c.bf16 %v348, %v347
    %v363 = vpack.c.bf16 %v350, %v349
    %v364 = vpack.c.bf16 %v352, %v351
    %v365 = vpack.c.bf16 %v354, %v353
    %v366 = vpack.c.bf16 %v356, %v355
    %v367 = vpack.c.bf16 %v358, %v357
    %v368 = vpack.c.bf16 %v360, %v359
    %v377 = vunpack.c.l.b16 %v361
    %v378 = vunpack.c.h.b16 %v361
    %v379 = vunpack.c.l.b16 %v362
    %v380 = vunpack.c.h.b16 %v362
    %v381 = vunpack.c.l.b16 %v363
    %v382 = vunpack.c.h.b16 %v363
    %v383 = vunpack.c.l.b16 %v364
    %v384 = vunpack.c.h.b16 %v364
    %v385 = vunpack.c.l.b16 %v365
    %v386 = vunpack.c.h.b16 %v365
    %v387 = vunpack.c.l.b16 %v366
    %v388 = vunpack.c.h.b16 %v366
    %v389 = vunpack.c.l.b16 %v367
    %v390 = vunpack.c.h.b16 %v367
    %v391 = vunpack.c.l.b16 %v368
    %v392 = vunpack.c.h.b16 %v368
    %v393 = vpack.c.b16 %v377, %v377
    %v394 = vpack.c.b16 %v378, %v378
    %v395 = vpack.c.b16 %v379, %v379
    %v396 = vpack.c.b16 %v380, %v380
    %v397 = vpack.c.b16 %v381, %v381
    %v398 = vpack.c.b16 %v382, %v382
    %v399 = vpack.c.b16 %v383, %v383
    %v400 = vpack.c.b16 %v384, %v384
    %v401 = vpack.c.b16 %v385, %v385
    %v402 = vpack.c.b16 %v386, %v386
    %v403 = vpack.c.b16 %v387, %v387
    %v404 = vpack.c.b16 %v388, %v388
    %v405 = vpack.c.b16 %v389, %v389
    %v406 = vpack.c.b16 %v390, %v390
    %v407 = vpack.c.b16 %v391, %v391
    %v408 = vpack.c.b16 %v392, %v392
    %425 = vst [vmem:[%s3] sm:$0xf] %v393
    %426 = vst [vmem:[%s3 + $0x4] sm:$0xf] %v394
    %427 = vst [vmem:[%s3 + $0x8] sm:$0xf] %v395
    %428 = vst [vmem:[%s3 + $0xc] sm:$0xf] %v396
    %429 = vst [vmem:[%s3 + $0x10] sm:$0xf] %v397
    %430 = vst [vmem:[%s3 + $0x14] sm:$0xf] %v398
    %431 = vst [vmem:[%s3 + $0x18] sm:$0xf] %v399
    %432 = vst [vmem:[%s3 + $0x1c] sm:$0xf] %v400
    %433 = vst [vmem:[%s3 + $0x20] sm:$0xf] %v401
    %434 = vst [vmem:[%s3 + $0x24] sm:$0xf] %v402
    %435 = vst [vmem:[%s3 + $0x28] sm:$0xf] %v403
    %436 = vst [vmem:[%s3 + $0x2c] sm:$0xf] %v404
    %437 = vst [vmem:[%s3 + $0x30] sm:$0xf] %v405
    %438 = vst [vmem:[%s3 + $0x34] sm:$0xf] %v406
    %439 = vst [vmem:[%s3 + $0x38] sm:$0xf] %v407
    %440 = vst [vmem:[%s3 + $0x3c] sm:$0xf] %v408
    %s441 = smul.u32 0, 128
    %v442 = vlaneseq
    %v443 = vshrl.u32 %v442, 7
    %v444 = vadd.s32 %v443, 8
    %v445 = vadd.s32 %v443, 16
    %v446 = vadd.s32 %v443, 24
    %v447 = vadd.s32 %v443, 32
    %v448 = vadd.s32 %v443, 40
    %v449 = vadd.s32 %v443, 48
    %v450 = vadd.s32 %v443, 56
    %v451 = vadd.s32 %v443, 64
    %v452 = vadd.s32 %v443, 72
    %v453 = vadd.s32 %v443, 80
    %v454 = vadd.s32 %v443, 88
    %v455 = vadd.s32 %v443, 96
    %v456 = vadd.s32 %v443, 104
    %v457 = vadd.s32 %v443, 112
    %v458 = vadd.s32 %v443, 120
    %v459 = vstv %s441
    %v460 = vadd.s32 %v459, %v443
    %v461 = vadd.s32 %v459, %v444
    %v462 = vadd.s32 %v459, %v445
    %v463 = vadd.s32 %v459, %v446
    %v464 = vadd.s32 %v459, %v447
    %v465 = vadd.s32 %v459, %v448
    %v466 = vadd.s32 %v459, %v449
    %v467 = vadd.s32 %v459, %v450
    %v468 = vadd.s32 %v459, %v451
    %v469 = vadd.s32 %v459, %v452
    %v470 = vadd.s32 %v459, %v453
    %v471 = vadd.s32 %v459, %v454
    %v472 = vadd.s32 %v459, %v455
    %v473 = vadd.s32 %v459, %v456
    %v474 = vadd.s32 %v459, %v457
    %v475 = vadd.s32 %v459, %v458
    %vm476 = vcmp.lt.s32.totalorder %v460, 16
    %vm477 = vcmp.lt.s32.totalorder %v461, 16
    %vm478 = vcmp.lt.s32.totalorder %v462, 16
    %vm479 = vcmp.lt.s32.totalorder %v463, 16
    %vm480 = vcmp.lt.s32.totalorder %v464, 16
    %vm481 = vcmp.lt.s32.totalorder %v465, 16
    %vm482 = vcmp.lt.s32.totalorder %v466, 16
    %vm483 = vcmp.lt.s32.totalorder %v467, 16
    %vm484 = vcmp.lt.s32.totalorder %v468, 16
    %vm485 = vcmp.lt.s32.totalorder %v469, 16
    %vm486 = vcmp.lt.s32.totalorder %v470, 16
    %vm487 = vcmp.lt.s32.totalorder %v471, 16
    %vm488 = vcmp.lt.s32.totalorder %v472, 16
    %vm489 = vcmp.lt.s32.totalorder %v473, 16
    %vm490 = vcmp.lt.s32.totalorder %v474, 16
    %vm491 = vcmp.lt.s32.totalorder %v475, 16
    %v492 = vsel %vm476, 1, 0
    %v493 = vsel %vm477, 1, 0
    %v494 = vsel %vm478, 1, 0
    %v495 = vsel %vm479, 1, 0
    %v496 = vsel %vm480, 1, 0
    %v497 = vsel %vm481, 1, 0
    %v498 = vsel %vm482, 1, 0
    %v499 = vsel %vm483, 1, 0
    %v500 = vsel %vm484, 1, 0
    %v501 = vsel %vm485, 1, 0
    %v502 = vsel %vm486, 1, 0
    %v503 = vsel %vm487, 1, 0
    %v504 = vsel %vm488, 1, 0
    %v505 = vsel %vm489, 1, 0
    %v506 = vsel %vm490, 1, 0
    %v507 = vsel %vm491, 1, 0
    %v508 = vcvt.s32.f32 %v492
    %v509 = vcvt.s32.f32 %v493
    %v510 = vcvt.s32.f32 %v494
    %v511 = vcvt.s32.f32 %v495
    %v512 = vcvt.s32.f32 %v496
    %v513 = vcvt.s32.f32 %v497
    %v514 = vcvt.s32.f32 %v498
    %v515 = vcvt.s32.f32 %v499
    %v516 = vcvt.s32.f32 %v500
    %v517 = vcvt.s32.f32 %v501
    %v518 = vcvt.s32.f32 %v502
    %v519 = vcvt.s32.f32 %v503
    %v520 = vcvt.s32.f32 %v504
    %v521 = vcvt.s32.f32 %v505
    %v522 = vcvt.s32.f32 %v506
    %v523 = vcvt.s32.f32 %v507
    %s524 = ssub.s32 16, %s441
    %p525 = scmp.lt.s32.totalorder %s524, 128
    %s526 = scalar_select %p525, %s524, 128
    %p527 = scmp.gt.s32.totalorder %s526, 1
    %s528 = scalar_select %p527, %s526, 1
    %s529 = scvt.s32.f32 %s528
    %v530 = vmul.f32 %v345, %v508
    %v531 = vmul.f32 %v346, %v509
    %v532 = vmul.f32 %v347, %v510
    %v533 = vmul.f32 %v348, %v511
    %v534 = vmul.f32 %v349, %v512
    %v535 = vmul.f32 %v350, %v513
    %v536 = vmul.f32 %v351, %v514
    %v537 = vmul.f32 %v352, %v515
    %v538 = vmul.f32 %v353, %v516
    %v539 = vmul.f32 %v354, %v517
    %v540 = vmul.f32 %v355, %v518
    %v541 = vmul.f32 %v356, %v519
    %v542 = vmul.f32 %v357, %v520
    %v543 = vmul.f32 %v358, %v521
    %v544 = vmul.f32 %v359, %v522
    %v545 = vmul.f32 %v360, %v523
    %v546 = vadd.f32 %v530, %v531
    %v547 = vadd.f32 %v546, %v532
    %v548 = vadd.f32 %v547, %v533
    %v549 = vadd.f32 %v548, %v534
    %v550 = vadd.f32 %v549, %v535
    %v551 = vadd.f32 %v550, %v536
    %v552 = vadd.f32 %v551, %v537
    %v553 = vadd.f32 %v552, %v538
    %v554 = vadd.f32 %v553, %v539
    %v555 = vadd.f32 %v554, %v540
    %v556 = vadd.f32 %v555, %v541
    %v557 = vadd.f32 %v556, %v542
    %v558 = vadd.f32 %v557, %v543
    %v559 = vadd.f32 %v558, %v544
    %v560 = vadd.f32 %v559, %v545
    %v561 = vrot.slane %v560, 4
    %v562 = vadd.f32 %v560, %v561
    %v563 = vrot.slane %v562, 2
    %v564 = vadd.f32 %v562, %v563
    %v565 = vrot.slane %v564, 1
    %v566 = vadd.f32 %v564, %v565
    %v567 = vstv %s529
    %v568 = vrcp.pop %v567
    %v569 = vmul.f32 %v566, %v568
    %v570 = vsub.f32 %v345, %v569
    %v571 = vsub.f32 %v346, %v569
    %v572 = vsub.f32 %v347, %v569
    %v573 = vsub.f32 %v348, %v569
    %v574 = vsub.f32 %v349, %v569
    %v575 = vsub.f32 %v350, %v569
    %v576 = vsub.f32 %v351, %v569
    %v577 = vsub.f32 %v352, %v569
    %v578 = vsub.f32 %v353, %v569
    %v579 = vsub.f32 %v354, %v569
    %v580 = vsub.f32 %v355, %v569
    %v581 = vsub.f32 %v356, %v569
    %v582 = vsub.f32 %v357, %v569
    %v583 = vsub.f32 %v358, %v569
    %v584 = vsub.f32 %v359, %v569
    %v585 = vsub.f32 %v360, %v569
    %v586 = vmul.f32 %v570, %v508
    %v587 = vmul.f32 %v571, %v509
    %v588 = vmul.f32 %v572, %v510
    %v589 = vmul.f32 %v573, %v511
    %v590 = vmul.f32 %v574, %v512
    %v591 = vmul.f32 %v575, %v513
    %v592 = vmul.f32 %v576, %v514
    %v593 = vmul.f32 %v577, %v515
    %v594 = vmul.f32 %v578, %v516
    %v595 = vmul.f32 %v579, %v517
    %v596 = vmul.f32 %v580, %v518
    %v597 = vmul.f32 %v581, %v519
    %v598 = vmul.f32 %v582, %v520
    %v599 = vmul.f32 %v583, %v521
    %v600 = vmul.f32 %v584, %v522
    %v601 = vmul.f32 %v585, %v523
    %v602 = vmul.f32 %v586, %v586
    %v603 = vmul.f32 %v587, %v587
    %v604 = vmul.f32 %v588, %v588
    %v605 = vmul.f32 %v589, %v589
    %v606 = vmul.f32 %v590, %v590
    %v607 = vmul.f32 %v591, %v591
    %v608 = vmul.f32 %v592, %v592
    %v609 = vmul.f32 %v593, %v593
    %v610 = vmul.f32 %v594, %v594
    %v611 = vmul.f32 %v595, %v595
    %v612 = vmul.f32 %v596, %v596
    %v613 = vmul.f32 %v597, %v597
    %v614 = vmul.f32 %v598, %v598
    %v615 = vmul.f32 %v599, %v599
    %v616 = vmul.f32 %v600, %v600
    %v617 = vmul.f32 %v601, %v601
    %v618 = vadd.f32 %v602, %v603
    %v619 = vadd.f32 %v618, %v604
    %v620 = vadd.f32 %v619, %v605
    %v621 = vadd.f32 %v620, %v606
    %v622 = vadd.f32 %v621, %v607
    %v623 = vadd.f32 %v622, %v608
    %v624 = vadd.f32 %v623, %v609
    %v625 = vadd.f32 %v624, %v610
    %v626 = vadd.f32 %v625, %v611
    %v627 = vadd.f32 %v626, %v612
    %v628 = vadd.f32 %v627, %v613
    %v629 = vadd.f32 %v628, %v614
    %v630 = vadd.f32 %v629, %v615
    %v631 = vadd.f32 %v630, %v616
    %v632 = vadd.f32 %v631, %v617
    %v633 = vrot.slane %v632, 4
    %v634 = vadd.f32 %v632, %v633
    %v635 = vrot.slane %v634, 2
    %v636 = vadd.f32 %v634, %v635
    %v637 = vrot.slane %v636, 1
    %v638 = vadd.f32 %v636, %v637
    %vm639 = vcmask 1040384
    %v640 = vsel %vm639, %v566, %v638
    %641 = vst [vmem:[%s4] sm:$0x3] %v640
  $region21: #{graph_conv_bn.4} parent=0 // pred_fallthru
    _
  // Predicated region
  $region22: #{graph_conv_bn.4} parent=0 // pred_check
    _
  $region23: #{graph_conv_bn.4} parent=0 // pred_check_branch
    %643 = sbr.rel (0) target = $region25
  $region24: #{graph_conv_bn.4} parent=0 // pred_region
    _
  $region25: #{graph_conv_bn.4} parent=0 // pred_fallthru
    _
  // Predicated region
  $region26: #{graph_conv_bn.4} parent=0 // pred_check
    _
  $region27: #{graph_conv_bn.4} parent=0 // pred_check_branch
    %645 = sbr.rel (0) target = $region29
  $region28: #{graph_conv_bn.4} parent=0 // pred_region
    _
  $region29: #{graph_conv_bn.4} parent=0 // pred_fallthru
    _
  // Predicated region
  $region30: #{graph_conv_bn.4} parent=0 // pred_check
    _
  $region31: #{graph_conv_bn.4} parent=0 // pred_check_branch
    %647 = sbr.rel (0) target = $region33
  $region32: #{graph_conv_bn.4} parent=0 // pred_region
    _
  $region33: #{graph_conv_bn.4} parent=0 // pred_fallthru
    _
  // Predicated region
  $region34: #{graph_conv_bn.4} parent=0 // pred_check
    _
  $region35: #{graph_conv_bn.4} parent=0 // pred_check_branch
    %649 = sbr.rel (0) target = $region37
  $region36: #{graph_conv_bn.4} parent=0 // pred_region
    _
  $region37: #{graph_conv_bn.4} parent=0 // pred_fallthru
    _

</llo_original>
